<compile_context>
chip_gen: v7x
topology: tpu7x:2x2x1
jax: 0.10.0
libtpu: 0.0.40
codegen_flags: <defaults>
</compile_context>

<pallas_src>
import functools
from collections import defaultdict

import jax
import jax.numpy as jnp
from jax.experimental import pallas as pl
from jax.experimental.pallas import tpu as pltpu

# ---------------------------------------------------------------------------
# Sizes (small, lane/sublane friendly).
# ---------------------------------------------------------------------------
B = 8        # batch
F = 32       # sender input features
FPAD = 128   # padded sender K dim (lane / MXU aligned)
L = 8        # message length
V = 128      # vocabulary size (lane-aligned)
T = 128      # receiver "target" feature width
C = 128      # number of classes (label product must be < C)
STATS_W = 128   # lane-dense stats output width

# stats lane indices
_OPT, _ACC, _ENT_S, _ENT_R, _LOSS = 0, 1, 2, 3, 4


def _vmem():
    return pl.BlockSpec(memory_space=pltpu.MemorySpace.VMEM)


def _smem():
    return pl.BlockSpec(memory_space=pltpu.MemorySpace.SMEM)


# ---------------------------------------------------------------------------
# Fused game kernel.
# ---------------------------------------------------------------------------
def _game_kernel(baseline_ref,                    # SMEM (1,)          f32
                 x_ref,                           # (B, FPAD)          f32
                 ws_ref,                          # (FPAD, L*V)        bf16
                 bs_ref,                          # (1, L*V)           f32
                 labels_ref,                      # (B, 2)             i32
                 target_ref,                      # (B, T)             f32
                 wct_hbm,                         # (L*V + T, C)       bf16, HBM
                 br_ref,                          # (1, C)             f32
                 stats_ref,                       # out (1, 128)       f32
                 wct_vmem,                        # scratch (L*V+T, C) bf16
                 dma_sem,                         # scratch DMA sem (1,)
                 *, batch, msg_len, vocab):
    # Kick off the receiver-weight DMA immediately; it is the largest HBM
    # transfer (288 KiB) and is fully hidden behind the sender phase.
    wct_cp = pltpu.make_async_copy(wct_hbm, wct_vmem, dma_sem.at[0])
    wct_cp.start()

    # ------------------------- sender --------------------------------------
    x_bf = x_ref[...].astype(jnp.bfloat16)
    logits_all = (jnp.dot(x_bf, ws_ref[...],
                          preferred_element_type=jnp.float32)
                  + bs_ref[...])                                   # (B, L*V) f32

    lp_sum = jnp.zeros((batch, 1), jnp.float32)
    ent_sum = jnp.zeros((batch, 1), jnp.float32)
    blocks = []                       # receiver input built in registers (bf16)

    for l in range(msg_len):                                       # static unroll
        lg = logits_all[:, l * vocab:(l + 1) * vocab]              # (B, V)
        mx = jnp.max(lg, axis=-1, keepdims=True)                   # (B, 1)
        ex = jnp.exp(lg - mx)
        z = jnp.sum(ex, axis=-1, keepdims=True)
        log_z = jnp.log(z)                                         # logsumexp - mx
        # greedy symbol => chosen log-prob = mx - (mx + log z) = -log z
        lp_sum = lp_sum - log_z
        # entropy = (mx + log z) - sum(softmax * lg)   (exact division)
        ent_sum = ent_sum + (mx + log_z
                             - jnp.sum(ex * lg, axis=-1, keepdims=True) / z)
        # TODO(synk): (lg == mx) would be multi-hot on exact logit ties; for
        # f32 logits ties have measure zero and this saves one XLU reduce per
        # position versus a min-index argmax.
        blocks.append((lg == mx).astype(jnp.bfloat16))             # (B, V) bf16

    blocks.append(target_ref[...].astype(jnp.bfloat16))            # (B, T) bf16
    recv_in = jnp.concatenate(blocks, axis=-1)                     # (B, L*V + T)

    # ------------------------- receiver ------------------------------------
    wct_cp.wait()                       # weights now resident in VMEM scratch
    r_logits = (jnp.dot(recv_in, wct_vmem[...],
                        preferred_element_type=jnp.float32)
                + br_ref[...])                                     # (B, C)

    mx_r = jnp.max(r_logits, axis=-1, keepdims=True)
    ex_r = jnp.exp(r_logits - mx_r)
    z_r = jnp.sum(ex_r, axis=-1, keepdims=True)
    log_z_r = mx_r + jnp.log(z_r)
    ent_r = log_z_r - jnp.sum(ex_r * r_logits, axis=-1, keepdims=True) / z_r

    lab = labels_ref[...]                                          # (B, 2) i32
    lbl = lab[:, 0:1] * lab[:, 1:2]                                # (B, 1) i32
    iota_c = jax.lax.broadcasted_iota(jnp.int32, r_logits.shape, 1)
    picked = jnp.sum(jnp.where(iota_c == lbl, r_logits, 0.0),
                     axis=-1, keepdims=True)
    loss = log_z_r - picked                       # F.cross_entropy(reduction='none')

    # argmax with min-index tie-break (matches jnp.argmax); needed only once.
    pred = jnp.min(jnp.where(r_logits == mx_r, iota_c, r_logits.shape[-1]),
                   axis=-1, keepdims=True)
    acc = (pred == lbl).astype(jnp.float32)                        # (B, 1)

    # ------------------------- REINFORCE reduction --------------------------
    baseline = baseline_ref[0]
    inv_b = 1.0 / batch
    lp_mean = lp_sum * (1.0 / msg_len)                             # log_prob_s.mean(1)
    policy_loss = jnp.sum((loss - baseline) * lp_mean, keepdims=True) * inv_b
    loss_mean = jnp.sum(loss, keepdims=True) * inv_b
    ent_s_mean = jnp.sum(ent_sum, keepdims=True) * (1.0 / (batch * msg_len))
    ent_r_mean = jnp.sum(ent_r, keepdims=True) * inv_b
    acc_mean = jnp.sum(acc, keepdims=True) * inv_b
    opt = policy_loss + loss_mean - 0.2 * ent_s_mean               # (1, 1)

    # single lane-dense (1, 128) stats store
    iota_s = jax.lax.broadcasted_iota(jnp.int32, (1, STATS_W), 1)

    def lane(i):
        return (iota_s == i).astype(jnp.float32)

    stats_ref[...] = (opt * lane(_OPT)
                      + acc_mean * lane(_ACC)
                      + ent_s_mean * lane(_ENT_S)
                      + ent_r_mean * lane(_ENT_R)
                      + loss_mean * lane(_LOSS))


@functools.partial(jax.jit, static_argnames=("training",))
def _game_step(x, labels, target, ws_bf, bs, wct_bf, br,
               baseline, n_points, *, training):
    # zero-pad the sender input to K=128 (weights are padded once in __init__)
    x_pad = jnp.pad(x.astype(jnp.float32), ((0, 0), (0, FPAD - F)))
    baseline_arr = jnp.reshape(baseline, (1,)).astype(jnp.float32)

    stats = pl.pallas_call(
        functools.partial(_game_kernel, batch=B, msg_len=L, vocab=V),
        out_shape=jax.ShapeDtypeStruct((1, STATS_W), jnp.float32),
        in_specs=[_smem(),                               # baseline
                  _vmem(),                               # x (padded)
                  _vmem(),                               # Ws (padded, bf16)
                  _vmem(),                               # bs
                  _vmem(),                               # labels
                  _vmem(),                               # target
                  pl.BlockSpec(memory_space=pl.ANY),     # [Wr; Wt] stays in HBM
                  _vmem()],                              # br
        out_specs=_vmem(),
        scratch_shapes=[pltpu.VMEM((L * V + T, C), jnp.bfloat16),
                        pltpu.SemaphoreType.DMA((1,))],
    )(baseline_arr, x_pad, ws_bf, bs, labels, target, wct_bf, br)

    opt_loss = stats[0, _OPT]
    loss_mean = stats[0, _LOSS]
    # device-side running-mean baseline update (no host round-trip needed)
    if training:
        new_n = n_points + 1.0
        new_baseline = baseline + (loss_mean - baseline) / new_n
    else:
        new_n = n_points
        new_baseline = baseline
    return opt_loss, stats, new_baseline, new_n


# ---------------------------------------------------------------------------
# The game (host-side glue mirrors the PyTorch module).
# ---------------------------------------------------------------------------
class CompositionalGameReinforce:
    def __init__(self, sender_params, receiver_params):
        ws, bs = sender_params
        wr, wt, br = receiver_params
        # pre-cast weights to bf16 (MXU-native), pad Ws to K=128 and merge the
        # receiver weights once, outside the hot path.
        self.ws_bf = jnp.pad(ws, ((0, FPAD - F), (0, 0))).astype(jnp.bfloat16)
        self.bs = bs.astype(jnp.float32)
        self.wct_bf = jnp.concatenate([wr, wt], axis=0).astype(jnp.bfloat16)
        self.br = br.astype(jnp.float32)
        # device-resident REINFORCE baseline state (authoritative)
        self._baseline_dev = jnp.zeros((), jnp.float32)
        self._n_dev = jnp.zeros((), jnp.float32)
        # host mirrors kept only for API compatibility / logging
        self.mean_baseline = defaultdict(float)
        self.n_points = defaultdict(float)
        self.training = True

    def forward(self, sender_input, labels, target, sync_stats=True):
        opt_loss, stats, self._baseline_dev, self._n_dev = _game_step(
            sender_input, labels, target,
            self.ws_bf, self.bs, self.wct_bf, self.br,
            self._baseline_dev, self._n_dev, training=self.training)

        if not sync_stats:
            # training-loop fast path: zero host syncs; stats stay on device
            # (pull them every N steps for logging).
            return opt_loss, {'stats': stats}

        # exactly one blocking device->host transfer (512 B) when syncing
        s = jax.device_get(stats)[0]
        if self.training:
            # host mirror of the (already applied) device-side baseline update
            self.update_baseline('loss', float(s[_LOSS]))
        rest = {
            'acc': float(s[_ACC]),
            'loss': float(s[_OPT]),
            'sender_entropy': float(s[_ENT_S]),
            'receiver_entropy': float(s[_ENT_R]),
            'original_loss': float(s[_LOSS]),
        }
        return opt_loss, rest

    def update_baseline(self, name, value):
        self.n_points[name] += 1
        self.mean_baseline[name] += (
            value - self.mean_baseline[name]) / self.n_points[name]


# ---------------------------------------------------------------------------
# Pure-JAX reference of the same math (correctness sanity check).
# ---------------------------------------------------------------------------
def _reference(sender_input, labels, target, ws_bf, bs, wct_bf, br, baseline=0.0):
    ws = ws_bf.astype(jnp.float32)[:F]          # strip zero padding
    wct = wct_bf.astype(jnp.float32)
    xb = sender_input.astype(jnp.bfloat16).astype(jnp.float32)
    tb = target.astype(jnp.bfloat16).astype(jnp.float32)

    logits = (xb @ ws + bs).reshape(B, L, V)
    logp_all = jax.nn.log_softmax(logits, axis=-1)
    msg = jnp.argmax(logits, axis=-1)
    log_prob_s = jnp.max(logp_all, axis=-1)                     # logp of argmax
    entropy_s = -jnp.sum(jnp.exp(logp_all) * logp_all, axis=-1)
    onehot = jax.nn.one_hot(msg, V, dtype=jnp.float32).reshape(B, L * V)

    r_logits = jnp.concatenate([onehot, tb], axis=1) @ wct + br
    lbl = labels[:, 0] * labels[:, 1]
    log_z = jax.nn.logsumexp(r_logits, axis=-1)
    loss = log_z - jnp.take_along_axis(r_logits, lbl[:, None], axis=1)[:, 0]

    policy = jnp.mean((loss - baseline) * jnp.mean(log_prob_s, axis=1))
    return policy + jnp.mean(loss) - 0.2 * jnp.mean(entropy_s)


# ---------------------------------------------------------------------------
if __name__ == "__main__":
    key = jax.random.PRNGKey(0)
    k1, k2, k3, k4, k5, k6, k7, k8 = jax.random.split(key, 8)

    # deterministic synthetic parameters
    ws = jax.random.normal(k1, (F, L * V), jnp.float32) * 0.05
    bs = jax.random.normal(k2, (1, L * V), jnp.float32) * 0.05
    wr = jax.random.normal(k3, (L * V, C), jnp.float32) * 0.05
    wt = jax.random.normal(k4, (T, C), jnp.float32) * 0.05
    br = jax.random.normal(k5, (1, C), jnp.float32) * 0.05

    # deterministic inputs
    sender_input = jax.random.normal(k6, (B, F), jnp.float32)
    labels = jax.random.randint(k7, (B, 2), 0, 8, jnp.int32)   # product < 64 < C
    target = jax.random.normal(k8, (B, T), jnp.float32)

    game = CompositionalGameReinforce((ws, bs), (wr, wt, br))
    optimized_loss, rest = game.forward(sender_input, labels, target)
    optimized_loss = jax.block_until_ready(optimized_loss)

    ref = _reference(sender_input, labels, target,
                     game.ws_bf, game.bs, game.wct_bf, game.br, baseline=0.0)
    assert jnp.allclose(optimized_loss, ref, atol=2e-3, rtol=2e-3), (
        optimized_loss, ref)

    print("KERNEL_OK")
</pallas_src>

<mosaic_0001>
module attributes {stable_mosaic.version = 11 : i64} {
  func.func @_game_kernel(%arg0: memref<1xf32, #tpu.memory_space<smem>>, %arg1: memref<8x128xf32, #tpu.memory_space<vmem>>, %arg2: memref<128x1024xbf16, #tpu.memory_space<vmem>>, %arg3: memref<1x1024xf32, #tpu.memory_space<vmem>>, %arg4: memref<8x2xi32, #tpu.memory_space<vmem>>, %arg5: memref<8x128xf32, #tpu.memory_space<vmem>>, %arg6: memref<1152x128xbf16, #tpu.memory_space<any>>, %arg7: memref<1x128xf32, #tpu.memory_space<vmem>>, %arg8: memref<1x128xf32, #tpu.memory_space<vmem>>, %arg9: memref<1152x128xbf16, #tpu.memory_space<vmem>>, %arg10: memref<1x!tpu.dma_semaphore, #tpu.memory_space<semaphore_mem>>) attributes {dimension_semantics = [], scalar_prefetch = 0 : i64, scratch_operands = 2 : i64, tpu.core_type = #tpu.core_type<tc>} {
    %c0_i32 = arith.constant 0 : i32
    %0 = tpu.memref_slice %arg10[%c0_i32] : memref<1x!tpu.dma_semaphore, #tpu.memory_space<semaphore_mem>> -> memref<1x!tpu.dma_semaphore, #tpu.memory_space<semaphore_mem>>
    %1 = tpu.memref_squeeze %0 : memref<1x!tpu.dma_semaphore, #tpu.memory_space<semaphore_mem>> -> memref<!tpu.dma_semaphore, #tpu.memory_space<semaphore_mem>>
    tpu.enqueue_dma source(%arg6 : memref<1152x128xbf16, #tpu.memory_space<any>>) target(%arg9 : memref<1152x128xbf16, #tpu.memory_space<vmem>>) target_semaphore(%1 : memref<!tpu.dma_semaphore, #tpu.memory_space<semaphore_mem>>)
    %c0 = arith.constant 0 : index
    %c0_0 = arith.constant 0 : index
    %2 = vector.load %arg1[%c0, %c0_0] : memref<8x128xf32, #tpu.memory_space<vmem>>, vector<8x128xf32>
    %3 = arith.truncf %2 : vector<8x128xf32> to vector<8x128xbf16>
    %c0_1 = arith.constant 0 : index
    %c0_2 = arith.constant 0 : index
    %4 = vector.load %arg2[%c0_1, %c0_2] : memref<128x1024xbf16, #tpu.memory_space<vmem>>, vector<128x1024xbf16>
    %cst = arith.constant dense<0.000000e+00> : vector<8x1024xf32>
    %5 = tpu.matmul %3, %4, %cst {dimension_numbers = #tpu.dot_dimension_numbers<[1], [0], [0], [1], [0, 0, 1, 1], [], []>} : vector<8x128xbf16>, vector<128x1024xbf16>, vector<8x1024xf32> -> vector<8x1024xf32>
    %c0_3 = arith.constant 0 : index
    %c0_4 = arith.constant 0 : index
    %6 = vector.load %arg3[%c0_3, %c0_4] : memref<1x1024xf32, #tpu.memory_space<vmem>>, vector<1x1024xf32>
    %7 = vector.broadcast %6 : vector<1x1024xf32> to vector<8x1024xf32>
    %8 = arith.addf %5, %7 : vector<8x1024xf32>
    %cst_5 = arith.constant 0.000000e+00 : f32
    %9 = vector.broadcast %cst_5 : f32 to vector<8x1xf32>
    %cst_6 = arith.constant 0.000000e+00 : f32
    %10 = vector.broadcast %cst_6 : f32 to vector<8x1xf32>
    %11 = vector.extract_strided_slice %8 {offsets = [0, 0], sizes = [8, 128], strides = [1, 1]} : vector<8x1024xf32> to vector<8x128xf32>
    %cst_7 = arith.constant dense<0xFF800000> : vector<8xf32>
    %12 = vector.multi_reduction <maximumf>, %11, %cst_7 [1] : vector<8x128xf32> to vector<8xf32>
    %13 = vector.shape_cast %12 : vector<8xf32> to vector<8x1xf32>
    %14 = vector.broadcast %13 : vector<8x1xf32> to vector<8x128xf32>
    %15 = arith.subf %11, %14 : vector<8x128xf32>
    %16 = math.exp %15 : vector<8x128xf32>
    %cst_8 = arith.constant dense<0.000000e+00> : vector<8xf32>
    %17 = vector.multi_reduction <add>, %16, %cst_8 [1] : vector<8x128xf32> to vector<8xf32>
    %18 = vector.shape_cast %17 : vector<8xf32> to vector<8x1xf32>
    %19 = math.log %18 : vector<8x1xf32>
    %20 = arith.subf %9, %19 : vector<8x1xf32>
    %21 = arith.addf %13, %19 : vector<8x1xf32>
    %22 = arith.mulf %16, %11 : vector<8x128xf32>
    %cst_9 = arith.constant dense<0.000000e+00> : vector<8xf32>
    %23 = vector.multi_reduction <add>, %22, %cst_9 [1] : vector<8x128xf32> to vector<8xf32>
    %24 = vector.shape_cast %23 : vector<8xf32> to vector<8x1xf32>
    %25 = arith.divf %24, %18 : vector<8x1xf32>
    %26 = arith.subf %21, %25 : vector<8x1xf32>
    %27 = arith.addf %10, %26 : vector<8x1xf32>
    %28 = vector.broadcast %13 : vector<8x1xf32> to vector<8x128xf32>
    %29 = arith.cmpf oeq, %11, %28 : vector<8x128xf32>
    %30 = arith.extui %29 : vector<8x128xi1> to vector<8x128xi32>
    %31 = arith.sitofp %30 : vector<8x128xi32> to vector<8x128xf32>
    %32 = arith.truncf %31 : vector<8x128xf32> to vector<8x128xbf16>
    %33 = vector.extract_strided_slice %8 {offsets = [0, 128], sizes = [8, 128], strides = [1, 1]} : vector<8x1024xf32> to vector<8x128xf32>
    %cst_10 = arith.constant dense<0xFF800000> : vector<8xf32>
    %34 = vector.multi_reduction <maximumf>, %33, %cst_10 [1] : vector<8x128xf32> to vector<8xf32>
    %35 = vector.shape_cast %34 : vector<8xf32> to vector<8x1xf32>
    %36 = vector.broadcast %35 : vector<8x1xf32> to vector<8x128xf32>
    %37 = arith.subf %33, %36 : vector<8x128xf32>
    %38 = math.exp %37 : vector<8x128xf32>
    %cst_11 = arith.constant dense<0.000000e+00> : vector<8xf32>
    %39 = vector.multi_reduction <add>, %38, %cst_11 [1] : vector<8x128xf32> to vector<8xf32>
    %40 = vector.shape_cast %39 : vector<8xf32> to vector<8x1xf32>
    %41 = math.log %40 : vector<8x1xf32>
    %42 = arith.subf %20, %41 : vector<8x1xf32>
    %43 = arith.addf %35, %41 : vector<8x1xf32>
    %44 = arith.mulf %38, %33 : vector<8x128xf32>
    %cst_12 = arith.constant dense<0.000000e+00> : vector<8xf32>
    %45 = vector.multi_reduction <add>, %44, %cst_12 [1] : vector<8x128xf32> to vector<8xf32>
    %46 = vector.shape_cast %45 : vector<8xf32> to vector<8x1xf32>
    %47 = arith.divf %46, %40 : vector<8x1xf32>
    %48 = arith.subf %43, %47 : vector<8x1xf32>
    %49 = arith.addf %27, %48 : vector<8x1xf32>
    %50 = vector.broadcast %35 : vector<8x1xf32> to vector<8x128xf32>
    %51 = arith.cmpf oeq, %33, %50 : vector<8x128xf32>
    %52 = arith.extui %51 : vector<8x128xi1> to vector<8x128xi32>
    %53 = arith.sitofp %52 : vector<8x128xi32> to vector<8x128xf32>
    %54 = arith.truncf %53 : vector<8x128xf32> to vector<8x128xbf16>
    %55 = vector.extract_strided_slice %8 {offsets = [0, 256], sizes = [8, 128], strides = [1, 1]} : vector<8x1024xf32> to vector<8x128xf32>
    %cst_13 = arith.constant dense<0xFF800000> : vector<8xf32>
    %56 = vector.multi_reduction <maximumf>, %55, %cst_13 [1] : vector<8x128xf32> to vector<8xf32>
    %57 = vector.shape_cast %56 : vector<8xf32> to vector<8x1xf32>
    %58 = vector.broadcast %57 : vector<8x1xf32> to vector<8x128xf32>
    %59 = arith.subf %55, %58 : vector<8x128xf32>
    %60 = math.exp %59 : vector<8x128xf32>
    %cst_14 = arith.constant dense<0.000000e+00> : vector<8xf32>
    %61 = vector.multi_reduction <add>, %60, %cst_14 [1] : vector<8x128xf32> to vector<8xf32>
    %62 = vector.shape_cast %61 : vector<8xf32> to vector<8x1xf32>
    %63 = math.log %62 : vector<8x1xf32>
    %64 = arith.subf %42, %63 : vector<8x1xf32>
    %65 = arith.addf %57, %63 : vector<8x1xf32>
    %66 = arith.mulf %60, %55 : vector<8x128xf32>
    %cst_15 = arith.constant dense<0.000000e+00> : vector<8xf32>
    %67 = vector.multi_reduction <add>, %66, %cst_15 [1] : vector<8x128xf32> to vector<8xf32>
    %68 = vector.shape_cast %67 : vector<8xf32> to vector<8x1xf32>
    %69 = arith.divf %68, %62 : vector<8x1xf32>
    %70 = arith.subf %65, %69 : vector<8x1xf32>
    %71 = arith.addf %49, %70 : vector<8x1xf32>
    %72 = vector.broadcast %57 : vector<8x1xf32> to vector<8x128xf32>
    %73 = arith.cmpf oeq, %55, %72 : vector<8x128xf32>
    %74 = arith.extui %73 : vector<8x128xi1> to vector<8x128xi32>
    %75 = arith.sitofp %74 : vector<8x128xi32> to vector<8x128xf32>
    %76 = arith.truncf %75 : vector<8x128xf32> to vector<8x128xbf16>
    %77 = vector.extract_strided_slice %8 {offsets = [0, 384], sizes = [8, 128], strides = [1, 1]} : vector<8x1024xf32> to vector<8x128xf32>
    %cst_16 = arith.constant dense<0xFF800000> : vector<8xf32>
    %78 = vector.multi_reduction <maximumf>, %77, %cst_16 [1] : vector<8x128xf32> to vector<8xf32>
    %79 = vector.shape_cast %78 : vector<8xf32> to vector<8x1xf32>
    %80 = vector.broadcast %79 : vector<8x1xf32> to vector<8x128xf32>
    %81 = arith.subf %77, %80 : vector<8x128xf32>
    %82 = math.exp %81 : vector<8x128xf32>
    %cst_17 = arith.constant dense<0.000000e+00> : vector<8xf32>
    %83 = vector.multi_reduction <add>, %82, %cst_17 [1] : vector<8x128xf32> to vector<8xf32>
    %84 = vector.shape_cast %83 : vector<8xf32> to vector<8x1xf32>
    %85 = math.log %84 : vector<8x1xf32>
    %86 = arith.subf %64, %85 : vector<8x1xf32>
    %87 = arith.addf %79, %85 : vector<8x1xf32>
    %88 = arith.mulf %82, %77 : vector<8x128xf32>
    %cst_18 = arith.constant dense<0.000000e+00> : vector<8xf32>
    %89 = vector.multi_reduction <add>, %88, %cst_18 [1] : vector<8x128xf32> to vector<8xf32>
    %90 = vector.shape_cast %89 : vector<8xf32> to vector<8x1xf32>
    %91 = arith.divf %90, %84 : vector<8x1xf32>
    %92 = arith.subf %87, %91 : vector<8x1xf32>
    %93 = arith.addf %71, %92 : vector<8x1xf32>
    %94 = vector.broadcast %79 : vector<8x1xf32> to vector<8x128xf32>
    %95 = arith.cmpf oeq, %77, %94 : vector<8x128xf32>
    %96 = arith.extui %95 : vector<8x128xi1> to vector<8x128xi32>
    %97 = arith.sitofp %96 : vector<8x128xi32> to vector<8x128xf32>
    %98 = arith.truncf %97 : vector<8x128xf32> to vector<8x128xbf16>
    %99 = vector.extract_strided_slice %8 {offsets = [0, 512], sizes = [8, 128], strides = [1, 1]} : vector<8x1024xf32> to vector<8x128xf32>
    %cst_19 = arith.constant dense<0xFF800000> : vector<8xf32>
    %100 = vector.multi_reduction <maximumf>, %99, %cst_19 [1] : vector<8x128xf32> to vector<8xf32>
    %101 = vector.shape_cast %100 : vector<8xf32> to vector<8x1xf32>
    %102 = vector.broadcast %101 : vector<8x1xf32> to vector<8x128xf32>
    %103 = arith.subf %99, %102 : vector<8x128xf32>
    %104 = math.exp %103 : vector<8x128xf32>
    %cst_20 = arith.constant dense<0.000000e+00> : vector<8xf32>
    %105 = vector.multi_reduction <add>, %104, %cst_20 [1] : vector<8x128xf32> to vector<8xf32>
    %106 = vector.shape_cast %105 : vector<8xf32> to vector<8x1xf32>
    %107 = math.log %106 : vector<8x1xf32>
    %108 = arith.subf %86, %107 : vector<8x1xf32>
    %109 = arith.addf %101, %107 : vector<8x1xf32>
    %110 = arith.mulf %104, %99 : vector<8x128xf32>
    %cst_21 = arith.constant dense<0.000000e+00> : vector<8xf32>
    %111 = vector.multi_reduction <add>, %110, %cst_21 [1] : vector<8x128xf32> to vector<8xf32>
    %112 = vector.shape_cast %111 : vector<8xf32> to vector<8x1xf32>
    %113 = arith.divf %112, %106 : vector<8x1xf32>
    %114 = arith.subf %109, %113 : vector<8x1xf32>
    %115 = arith.addf %93, %114 : vector<8x1xf32>
    %116 = vector.broadcast %101 : vector<8x1xf32> to vector<8x128xf32>
    %117 = arith.cmpf oeq, %99, %116 : vector<8x128xf32>
    %118 = arith.extui %117 : vector<8x128xi1> to vector<8x128xi32>
    %119 = arith.sitofp %118 : vector<8x128xi32> to vector<8x128xf32>
    %120 = arith.truncf %119 : vector<8x128xf32> to vector<8x128xbf16>
    %121 = vector.extract_strided_slice %8 {offsets = [0, 640], sizes = [8, 128], strides = [1, 1]} : vector<8x1024xf32> to vector<8x128xf32>
    %cst_22 = arith.constant dense<0xFF800000> : vector<8xf32>
    %122 = vector.multi_reduction <maximumf>, %121, %cst_22 [1] : vector<8x128xf32> to vector<8xf32>
    %123 = vector.shape_cast %122 : vector<8xf32> to vector<8x1xf32>
    %124 = vector.broadcast %123 : vector<8x1xf32> to vector<8x128xf32>
    %125 = arith.subf %121, %124 : vector<8x128xf32>
    %126 = math.exp %125 : vector<8x128xf32>
    %cst_23 = arith.constant dense<0.000000e+00> : vector<8xf32>
    %127 = vector.multi_reduction <add>, %126, %cst_23 [1] : vector<8x128xf32> to vector<8xf32>
    %128 = vector.shape_cast %127 : vector<8xf32> to vector<8x1xf32>
    %129 = math.log %128 : vector<8x1xf32>
    %130 = arith.subf %108, %129 : vector<8x1xf32>
    %131 = arith.addf %123, %129 : vector<8x1xf32>
    %132 = arith.mulf %126, %121 : vector<8x128xf32>
    %cst_24 = arith.constant dense<0.000000e+00> : vector<8xf32>
    %133 = vector.multi_reduction <add>, %132, %cst_24 [1] : vector<8x128xf32> to vector<8xf32>
    %134 = vector.shape_cast %133 : vector<8xf32> to vector<8x1xf32>
    %135 = arith.divf %134, %128 : vector<8x1xf32>
    %136 = arith.subf %131, %135 : vector<8x1xf32>
    %137 = arith.addf %115, %136 : vector<8x1xf32>
    %138 = vector.broadcast %123 : vector<8x1xf32> to vector<8x128xf32>
    %139 = arith.cmpf oeq, %121, %138 : vector<8x128xf32>
    %140 = arith.extui %139 : vector<8x128xi1> to vector<8x128xi32>
    %141 = arith.sitofp %140 : vector<8x128xi32> to vector<8x128xf32>
    %142 = arith.truncf %141 : vector<8x128xf32> to vector<8x128xbf16>
    %143 = vector.extract_strided_slice %8 {offsets = [0, 768], sizes = [8, 128], strides = [1, 1]} : vector<8x1024xf32> to vector<8x128xf32>
    %cst_25 = arith.constant dense<0xFF800000> : vector<8xf32>
    %144 = vector.multi_reduction <maximumf>, %143, %cst_25 [1] : vector<8x128xf32> to vector<8xf32>
    %145 = vector.shape_cast %144 : vector<8xf32> to vector<8x1xf32>
    %146 = vector.broadcast %145 : vector<8x1xf32> to vector<8x128xf32>
    %147 = arith.subf %143, %146 : vector<8x128xf32>
    %148 = math.exp %147 : vector<8x128xf32>
    %cst_26 = arith.constant dense<0.000000e+00> : vector<8xf32>
    %149 = vector.multi_reduction <add>, %148, %cst_26 [1] : vector<8x128xf32> to vector<8xf32>
    %150 = vector.shape_cast %149 : vector<8xf32> to vector<8x1xf32>
    %151 = math.log %150 : vector<8x1xf32>
    %152 = arith.subf %130, %151 : vector<8x1xf32>
    %153 = arith.addf %145, %151 : vector<8x1xf32>
    %154 = arith.mulf %148, %143 : vector<8x128xf32>
    %cst_27 = arith.constant dense<0.000000e+00> : vector<8xf32>
    %155 = vector.multi_reduction <add>, %154, %cst_27 [1] : vector<8x128xf32> to vector<8xf32>
    %156 = vector.shape_cast %155 : vector<8xf32> to vector<8x1xf32>
    %157 = arith.divf %156, %150 : vector<8x1xf32>
    %158 = arith.subf %153, %157 : vector<8x1xf32>
    %159 = arith.addf %137, %158 : vector<8x1xf32>
    %160 = vector.broadcast %145 : vector<8x1xf32> to vector<8x128xf32>
    %161 = arith.cmpf oeq, %143, %160 : vector<8x128xf32>
    %162 = arith.extui %161 : vector<8x128xi1> to vector<8x128xi32>
    %163 = arith.sitofp %162 : vector<8x128xi32> to vector<8x128xf32>
    %164 = arith.truncf %163 : vector<8x128xf32> to vector<8x128xbf16>
    %165 = vector.extract_strided_slice %8 {offsets = [0, 896], sizes = [8, 128], strides = [1, 1]} : vector<8x1024xf32> to vector<8x128xf32>
    %cst_28 = arith.constant dense<0xFF800000> : vector<8xf32>
    %166 = vector.multi_reduction <maximumf>, %165, %cst_28 [1] : vector<8x128xf32> to vector<8xf32>
    %167 = vector.shape_cast %166 : vector<8xf32> to vector<8x1xf32>
    %168 = vector.broadcast %167 : vector<8x1xf32> to vector<8x128xf32>
    %169 = arith.subf %165, %168 : vector<8x128xf32>
    %170 = math.exp %169 : vector<8x128xf32>
    %cst_29 = arith.constant dense<0.000000e+00> : vector<8xf32>
    %171 = vector.multi_reduction <add>, %170, %cst_29 [1] : vector<8x128xf32> to vector<8xf32>
    %172 = vector.shape_cast %171 : vector<8xf32> to vector<8x1xf32>
    %173 = math.log %172 : vector<8x1xf32>
    %174 = arith.subf %152, %173 : vector<8x1xf32>
    %175 = arith.addf %167, %173 : vector<8x1xf32>
    %176 = arith.mulf %170, %165 : vector<8x128xf32>
    %cst_30 = arith.constant dense<0.000000e+00> : vector<8xf32>
    %177 = vector.multi_reduction <add>, %176, %cst_30 [1] : vector<8x128xf32> to vector<8xf32>
    %178 = vector.shape_cast %177 : vector<8xf32> to vector<8x1xf32>
    %179 = arith.divf %178, %172 : vector<8x1xf32>
    %180 = arith.subf %175, %179 : vector<8x1xf32>
    %181 = arith.addf %159, %180 : vector<8x1xf32>
    %182 = vector.broadcast %167 : vector<8x1xf32> to vector<8x128xf32>
    %183 = arith.cmpf oeq, %165, %182 : vector<8x128xf32>
    %184 = arith.extui %183 : vector<8x128xi1> to vector<8x128xi32>
    %185 = arith.sitofp %184 : vector<8x128xi32> to vector<8x128xf32>
    %186 = arith.truncf %185 : vector<8x128xf32> to vector<8x128xbf16>
    %c0_31 = arith.constant 0 : index
    %c0_32 = arith.constant 0 : index
    %187 = vector.load %arg5[%c0_31, %c0_32] : memref<8x128xf32, #tpu.memory_space<vmem>>, vector<8x128xf32>
    %188 = arith.truncf %187 : vector<8x128xf32> to vector<8x128xbf16>
    %189 = tpu.concatenate %32, %54, %76, %98, %120, %142, %164, %186, %188 in 1 : vector<8x128xbf16>, vector<8x128xbf16>, vector<8x128xbf16>, vector<8x128xbf16>, vector<8x128xbf16>, vector<8x128xbf16>, vector<8x128xbf16>, vector<8x128xbf16>, vector<8x128xbf16> -> vector<8x1152xbf16>
    %c0_i32_33 = arith.constant 0 : i32
    %190 = tpu.memref_slice %arg10[%c0_i32_33] : memref<1x!tpu.dma_semaphore, #tpu.memory_space<semaphore_mem>> -> memref<1x!tpu.dma_semaphore, #tpu.memory_space<semaphore_mem>>
    %191 = tpu.memref_squeeze %190 : memref<1x!tpu.dma_semaphore, #tpu.memory_space<semaphore_mem>> -> memref<!tpu.dma_semaphore, #tpu.memory_space<semaphore_mem>>
    tpu.wait_dma2 semaphore(%191 : memref<!tpu.dma_semaphore, #tpu.memory_space<semaphore_mem>>) src(%arg6 : memref<1152x128xbf16, #tpu.memory_space<any>>) dst(%arg9 : memref<1152x128xbf16, #tpu.memory_space<vmem>>)
    %c0_34 = arith.constant 0 : index
    %c0_35 = arith.constant 0 : index
    %192 = vector.load %arg9[%c0_34, %c0_35] : memref<1152x128xbf16, #tpu.memory_space<vmem>>, vector<1152x128xbf16>
    %cst_36 = arith.constant dense<0.000000e+00> : vector<8x128xf32>
    %193 = tpu.matmul %189, %192, %cst_36 {dimension_numbers = #tpu.dot_dimension_numbers<[1], [0], [0], [1], [0, 0, 1, 1], [], []>} : vector<8x1152xbf16>, vector<1152x128xbf16>, vector<8x128xf32> -> vector<8x128xf32>
    %c0_37 = arith.constant 0 : index
    %c0_38 = arith.constant 0 : index
    %194 = vector.load %arg7[%c0_37, %c0_38] : memref<1x128xf32, #tpu.memory_space<vmem>>, vector<1x128xf32>
    %195 = vector.broadcast %194 : vector<1x128xf32> to vector<8x128xf32>
    %196 = arith.addf %193, %195 : vector<8x128xf32>
    %cst_39 = arith.constant dense<0xFF800000> : vector<8xf32>
    %197 = vector.multi_reduction <maximumf>, %196, %cst_39 [1] : vector<8x128xf32> to vector<8xf32>
    %198 = vector.shape_cast %197 : vector<8xf32> to vector<8x1xf32>
    %199 = vector.broadcast %198 : vector<8x1xf32> to vector<8x128xf32>
    %200 = arith.subf %196, %199 : vector<8x128xf32>
    %201 = math.exp %200 : vector<8x128xf32>
    %cst_40 = arith.constant dense<0.000000e+00> : vector<8xf32>
    %202 = vector.multi_reduction <add>, %201, %cst_40 [1] : vector<8x128xf32> to vector<8xf32>
    %203 = vector.shape_cast %202 : vector<8xf32> to vector<8x1xf32>
    %204 = math.log %203 : vector<8x1xf32>
    %205 = arith.addf %198, %204 : vector<8x1xf32>
    %206 = arith.mulf %201, %196 : vector<8x128xf32>
    %cst_41 = arith.constant dense<0.000000e+00> : vector<8xf32>
    %207 = vector.multi_reduction <add>, %206, %cst_41 [1] : vector<8x128xf32> to vector<8xf32>
    %208 = vector.shape_cast %207 : vector<8xf32> to vector<8x1xf32>
    %209 = arith.divf %208, %203 : vector<8x1xf32>
    %210 = arith.subf %205, %209 : vector<8x1xf32>
    %c0_42 = arith.constant 0 : index
    %c0_43 = arith.constant 0 : index
    %211 = vector.load %arg4[%c0_42, %c0_43] : memref<8x2xi32, #tpu.memory_space<vmem>>, vector<8x2xi32>
    %212 = vector.extract_strided_slice %211 {offsets = [0, 0], sizes = [8, 1], strides = [1, 1]} : vector<8x2xi32> to vector<8x1xi32>
    %213 = vector.extract_strided_slice %211 {offsets = [0, 1], sizes = [8, 1], strides = [1, 1]} : vector<8x2xi32> to vector<8x1xi32>
    %214 = arith.muli %212, %213 : vector<8x1xi32>
    %215 = tpu.iota {dimensions = array<i32: 1>} : vector<8x128xi32>
    %216 = vector.broadcast %214 : vector<8x1xi32> to vector<8x128xi32>
    %217 = arith.cmpi eq, %215, %216 : vector<8x128xi32>
    %cst_44 = arith.constant 0.000000e+00 : f32
    %218 = vector.broadcast %cst_44 : f32 to vector<8x128xf32>
    %219 = arith.select %217, %196, %218 : vector<8x128xi1>, vector<8x128xf32>
    %cst_45 = arith.constant dense<0.000000e+00> : vector<8xf32>
    %220 = vector.multi_reduction <add>, %219, %cst_45 [1] : vector<8x128xf32> to vector<8xf32>
    %221 = vector.shape_cast %220 : vector<8xf32> to vector<8x1xf32>
    %222 = arith.subf %205, %221 : vector<8x1xf32>
    %223 = vector.broadcast %198 : vector<8x1xf32> to vector<8x128xf32>
    %224 = arith.cmpf oeq, %196, %223 : vector<8x128xf32>
    %c128_i32 = arith.constant 128 : i32
    %225 = vector.broadcast %c128_i32 : i32 to vector<8x128xi32>
    %226 = arith.select %224, %215, %225 : vector<8x128xi1>, vector<8x128xi32>
    %cst_46 = arith.constant dense<2147483647> : vector<8xi32>
    %227 = vector.multi_reduction <minsi>, %226, %cst_46 [1] : vector<8x128xi32> to vector<8xi32>
    %228 = vector.shape_cast %227 : vector<8xi32> to vector<8x1xi32>
    %229 = arith.cmpi eq, %228, %214 : vector<8x1xi32>
    %230 = arith.extui %229 : vector<8x1xi1> to vector<8x1xi32>
    %231 = arith.sitofp %230 : vector<8x1xi32> to vector<8x1xf32>
    %c0_47 = arith.constant 0 : index
    %232 = memref.load %arg0[%c0_47] : memref<1xf32, #tpu.memory_space<smem>>
    %cst_48 = arith.constant 1.250000e-01 : f32
    %233 = vector.broadcast %cst_48 : f32 to vector<8x1xf32>
    %234 = arith.mulf %174, %233 : vector<8x1xf32>
    %235 = vector.broadcast %232 : f32 to vector<8x1xf32>
    %236 = arith.subf %222, %235 : vector<8x1xf32>
    %237 = arith.mulf %236, %234 : vector<8x1xf32>
    %238 = vector.shape_cast %237 : vector<8x1xf32> to vector<1x8x1xf32>
    %cst_49 = arith.constant dense<0.000000e+00> : vector<1xf32>
    %239 = vector.multi_reduction <add>, %238, %cst_49 [1, 2] : vector<1x8x1xf32> to vector<1xf32>
    %240 = vector.shape_cast %239 : vector<1xf32> to vector<1x1x1xf32>
    %241 = vector.extract %240[0, 0, 0] : f32 from vector<1x1x1xf32>
    %242 = vector.broadcast %241 : f32 to vector<1x1xf32>
    %cst_50 = arith.constant 1.250000e-01 : f32
    %243 = vector.broadcast %cst_50 : f32 to vector<1x1xf32>
    %244 = arith.mulf %242, %243 : vector<1x1xf32>
    %245 = vector.shape_cast %222 : vector<8x1xf32> to vector<1x8x1xf32>
    %cst_51 = arith.constant dense<0.000000e+00> : vector<1xf32>
    %246 = vector.multi_reduction <add>, %245, %cst_51 [1, 2] : vector<1x8x1xf32> to vector<1xf32>
    %247 = vector.shape_cast %246 : vector<1xf32> to vector<1x1x1xf32>
    %248 = vector.extract %247[0, 0, 0] : f32 from vector<1x1x1xf32>
    %249 = vector.broadcast %248 : f32 to vector<1x1xf32>
    %cst_52 = arith.constant 1.250000e-01 : f32
    %250 = vector.broadcast %cst_52 : f32 to vector<1x1xf32>
    %251 = arith.mulf %249, %250 : vector<1x1xf32>
    %252 = vector.shape_cast %181 : vector<8x1xf32> to vector<1x8x1xf32>
    %cst_53 = arith.constant dense<0.000000e+00> : vector<1xf32>
    %253 = vector.multi_reduction <add>, %252, %cst_53 [1, 2] : vector<1x8x1xf32> to vector<1xf32>
    %254 = vector.shape_cast %253 : vector<1xf32> to vector<1x1x1xf32>
    %255 = vector.extract %254[0, 0, 0] : f32 from vector<1x1x1xf32>
    %256 = vector.broadcast %255 : f32 to vector<1x1xf32>
    %cst_54 = arith.constant 1.562500e-02 : f32
    %257 = vector.broadcast %cst_54 : f32 to vector<1x1xf32>
    %258 = arith.mulf %256, %257 : vector<1x1xf32>
    %259 = vector.shape_cast %210 : vector<8x1xf32> to vector<1x8x1xf32>
    %cst_55 = arith.constant dense<0.000000e+00> : vector<1xf32>
    %260 = vector.multi_reduction <add>, %259, %cst_55 [1, 2] : vector<1x8x1xf32> to vector<1xf32>
    %261 = vector.shape_cast %260 : vector<1xf32> to vector<1x1x1xf32>
    %262 = vector.extract %261[0, 0, 0] : f32 from vector<1x1x1xf32>
    %263 = vector.broadcast %262 : f32 to vector<1x1xf32>
    %cst_56 = arith.constant 1.250000e-01 : f32
    %264 = vector.broadcast %cst_56 : f32 to vector<1x1xf32>
    %265 = arith.mulf %263, %264 : vector<1x1xf32>
    %266 = vector.shape_cast %231 : vector<8x1xf32> to vector<1x8x1xf32>
    %cst_57 = arith.constant dense<0.000000e+00> : vector<1xf32>
    %267 = vector.multi_reduction <add>, %266, %cst_57 [1, 2] : vector<1x8x1xf32> to vector<1xf32>
    %268 = vector.shape_cast %267 : vector<1xf32> to vector<1x1x1xf32>
    %269 = vector.extract %268[0, 0, 0] : f32 from vector<1x1x1xf32>
    %270 = vector.broadcast %269 : f32 to vector<1x1xf32>
    %cst_58 = arith.constant 1.250000e-01 : f32
    %271 = vector.broadcast %cst_58 : f32 to vector<1x1xf32>
    %272 = arith.mulf %270, %271 : vector<1x1xf32>
    %273 = arith.addf %244, %251 : vector<1x1xf32>
    %cst_59 = arith.constant 2.000000e-01 : f32
    %274 = vector.broadcast %cst_59 : f32 to vector<1x1xf32>
    %275 = arith.mulf %274, %258 : vector<1x1xf32>
    %276 = arith.subf %273, %275 : vector<1x1xf32>
    %277 = tpu.iota {dimensions = array<i32: 1>} : vector<1x128xi32>
    %c0_i32_60 = arith.constant 0 : i32
    %278 = vector.broadcast %c0_i32_60 : i32 to vector<1x128xi32>
    %279 = arith.cmpi eq, %277, %278 : vector<1x128xi32>
    %280 = arith.extui %279 : vector<1x128xi1> to vector<1x128xi32>
    %281 = arith.sitofp %280 : vector<1x128xi32> to vector<1x128xf32>
    %282 = vector.broadcast %276 : vector<1x1xf32> to vector<1x128xf32>
    %283 = arith.mulf %282, %281 : vector<1x128xf32>
    %c1_i32 = arith.constant 1 : i32
    %284 = vector.broadcast %c1_i32 : i32 to vector<1x128xi32>
    %285 = arith.cmpi eq, %277, %284 : vector<1x128xi32>
    %286 = arith.extui %285 : vector<1x128xi1> to vector<1x128xi32>
    %287 = arith.sitofp %286 : vector<1x128xi32> to vector<1x128xf32>
    %288 = vector.broadcast %272 : vector<1x1xf32> to vector<1x128xf32>
    %289 = arith.mulf %288, %287 : vector<1x128xf32>
    %290 = arith.addf %283, %289 : vector<1x128xf32>
    %c2_i32 = arith.constant 2 : i32
    %291 = vector.broadcast %c2_i32 : i32 to vector<1x128xi32>
    %292 = arith.cmpi eq, %277, %291 : vector<1x128xi32>
    %293 = arith.extui %292 : vector<1x128xi1> to vector<1x128xi32>
    %294 = arith.sitofp %293 : vector<1x128xi32> to vector<1x128xf32>
    %295 = vector.broadcast %258 : vector<1x1xf32> to vector<1x128xf32>
    %296 = arith.mulf %295, %294 : vector<1x128xf32>
    %297 = arith.addf %290, %296 : vector<1x128xf32>
    %c3_i32 = arith.constant 3 : i32
    %298 = vector.broadcast %c3_i32 : i32 to vector<1x128xi32>
    %299 = arith.cmpi eq, %277, %298 : vector<1x128xi32>
    %300 = arith.extui %299 : vector<1x128xi1> to vector<1x128xi32>
    %301 = arith.sitofp %300 : vector<1x128xi32> to vector<1x128xf32>
    %302 = vector.broadcast %265 : vector<1x1xf32> to vector<1x128xf32>
    %303 = arith.mulf %302, %301 : vector<1x128xf32>
    %304 = arith.addf %297, %303 : vector<1x128xf32>
    %c4_i32 = arith.constant 4 : i32
    %305 = vector.broadcast %c4_i32 : i32 to vector<1x128xi32>
    %306 = arith.cmpi eq, %277, %305 : vector<1x128xi32>
    %307 = arith.extui %306 : vector<1x128xi1> to vector<1x128xi32>
    %308 = arith.sitofp %307 : vector<1x128xi32> to vector<1x128xf32>
    %309 = vector.broadcast %251 : vector<1x1xf32> to vector<1x128xf32>
    %310 = arith.mulf %309, %308 : vector<1x128xf32>
    %311 = arith.addf %304, %310 : vector<1x128xf32>
    %c0_61 = arith.constant 0 : index
    %c0_62 = arith.constant 0 : index
    %312 = vector.load %arg8[%c0_61, %c0_62] : memref<1x128xf32, #tpu.memory_space<vmem>>, vector<1x128xf32>
    tpu.vector_store %arg8[%c0_61, %c0_62], %311 {strides = array<i32>} : memref<1x128xf32, #tpu.memory_space<vmem>>, vector<1x128xf32>,
    return
  }
}

</mosaic_0001>

<llo_original>
// kernel: _game_step.1
$region0: #{_game_step.1}
  #allocation0 [shape = 'u32[]', space=smem, size = 0x4, offset = 0x4, fixed_abs, tag = 'smem constant byte address 0x4 - core index']
  #allocation1 [shape = 'u32[144,128]{1,0:T(1,128)}', space=vmem, size = 0x12000, scoped, tag = 'internal scratch']
  #allocation2 [shape = 'bf16[1152,128]{1,0:T(16,128)(2,1)}', space=vmem, size = 0x48000, scoped, tag = 'scratch operand']
  #allocation3 [shape = 's32[1]{0}', space=sflag, size = 0x4, scoped, tag = 'scratch operand']
  #allocation4 [shape = 'f32[1]{0:T(128)S(6)}', space=smem, size = 0x200, scoped, tag = 'scoped memory for _game_step.1']
  #allocation7 [shape = 's32[]', space=sflag, size = 0x4, offset = 0, fixed_abs, tag = 'sflag constant byte address 0x0 - dummy sync flag']
  #allocation8 [shape = 's32[]', space=sflag, size = 0x4, offset = 0, fixed_abs, tag = 'sflag constant byte address 0x0 - dummy sync flag']
  #allocation9 [shape = 'u32[]', space=smem, size = 0x4, offset = 0x44, fixed_abs, tag = 'smem constant byte address 0x44 - assertion arg 0']
  #allocation10 [shape = 'u32[]', space=smem, size = 0x4, offset = 0x48, fixed_abs, tag = 'smem constant byte address 0x48 - assertion arg 1']
  %s0 = inlined_call_operand.<no memory space> [shape: f32[1], index: 0, kind: input, shape index: {}]
  %s1 = inlined_call_operand.vmem [shape: f32[8,128], index: 1, kind: input, shape index: {}]
  %s2 = inlined_call_operand.hbm [shape: bf16[128,1024], index: 2, kind: input, shape index: {}]
  %s3 = inlined_call_operand.vmem [shape: f32[1,1024], index: 3, kind: input, shape index: {}]
  %s4 = inlined_call_operand.vmem [shape: s32[8,2], index: 4, kind: input, shape index: {}]
  %s5 = inlined_call_operand.vmem [shape: f32[8,128], index: 5, kind: input, shape index: {}]
  %s6 = inlined_call_operand.hbm [shape: bf16[1152,128], index: 6, kind: input, shape index: {}]
  %s7 = inlined_call_operand.vmem [shape: f32[1,128], index: 7, kind: input, shape index: {}]
  %s8 = inlined_call_operand.vmem [shape: f32[1,128], index: 8, kind: output, shape index: {}]
  %s9 = sld [smem:[#allocation0]]
  $region46: #{_game_step.1} parent=0
    _
  %s11 = ssub.s32 1, %s9
  %s12 = scalar_select 0, %s11, %s9
  %13 = sst [smem:[#allocation4]] %s0
  $region1: #{_game_step.1} parent=0
    #allocation5 [shape = 'u8[262144]{0}', space=vmem, size = 0x40000, scoped, tag = 'input window, operand 2, single buffered']
    #allocation6 [shape = 's32[1]{0}', space=sflag, size = 0x4, scoped, tag = 'scoped memory for _game_step.1']
    %14 = vsyncpa [#allocation6], 0
    // Predicated region
    $region2: #{_game_step.1} parent=1 // pred_check
      _
    $region3: #{_game_step.1} parent=1 // pred_check_branch
      %16 = sbr.rel (0) target = $region5
    $region4: #{_game_step.1} parent=1 // pred_region
      _
    $region5: #{_game_step.1} parent=1 // pred_fallthru
      _
    // Predicated region
    $region6: #{_game_step.1} parent=1 // pred_check
      _
    $region7: #{_game_step.1} parent=1 // pred_check_branch
      %18 = sbr.rel (0) target = $region9
    $region8: #{_game_step.1} parent=1 // pred_region
      _
    $region9: #{_game_step.1} parent=1 // pred_fallthru
      _
    // Predicated region
    $region10: #{_game_step.1} parent=1 // pred_check
      _
    $region11: #{_game_step.1} parent=1 // pred_check_branch
      %20 = sbr.rel (0) target = $region13
    $region12: #{_game_step.1} parent=1 // pred_region
      %s22 = ssub.s32 8192, 8192
      %23 = vsyncadd [#allocation6], %s22
      %s24 = sshll.u32 [#allocation5], 4
      %s25 = int_to_ptr.vmem [resolvable:$true] %s24
      %30 = dma.hbm_to_vmem [thread:$0]  %s2, 8192, %s25, [#allocation6], 512, 512, 32
    $region13: #{_game_step.1} parent=1 // pred_fallthru
      _
    // Predicated region
    $region14: #{_game_step.1} parent=1 // pred_check
      _
    $region15: #{_game_step.1} parent=1 // pred_check_branch
      %32 = sbr.rel (0) target = $region17
    $region16: #{_game_step.1} parent=1 // pred_region
      _
    $region17: #{_game_step.1} parent=1 // pred_fallthru
      _
    // Predicated region
    $region18: #{_game_step.1} parent=1 // pred_check
      _
    $region19: #{_game_step.1} parent=1 // pred_check_branch
      %34 = sbr.rel (0) target = $region21
    $region20: #{_game_step.1} parent=1 // pred_region
      _
    $region21: #{_game_step.1} parent=1 // pred_fallthru
      _
    // Predicated region
    $region22: #{_game_step.1} parent=1 // pred_check
      _
    $region23: #{_game_step.1} parent=1 // pred_check_branch
      %36 = sbr.rel (0) target = $region25
    $region24: #{_game_step.1} parent=1 // pred_region
      _
    $region25: #{_game_step.1} parent=1 // pred_fallthru
      _
    // Predicated region
    $region26: #{_game_step.1} parent=1 // pred_check
      _
    $region27: #{_game_step.1} parent=1 // pred_check_branch
      %38 = sbr.rel (0) target = $region29
    $region28: #{_game_step.1} parent=1 // pred_region
      _
    $region29: #{_game_step.1} parent=1 // pred_fallthru
      _
    // Predicated region
    $region30: #{_game_step.1} parent=1 // pred_check
      _
    $region31: #{_game_step.1} parent=1 // pred_check_branch
      %40 = sbr.rel (0) target = $region33
    $region32: #{_game_step.1} parent=1 // pred_region
      %41 = dma.done [#allocation6], 8192
    $region33: #{_game_step.1} parent=1 // pred_fallthru
      _
    // Predicated region
    $region34: #{_game_step.1} parent=1 // pred_check
      _
    $region35: #{_game_step.1} parent=1 // pred_check_branch
      %44 = sbr.rel target = $region37
    $region36: #{_game_step.1} parent=1 // pred_region
      %45 = sst [smem:[#allocation9]] [#allocation8]
      %46 = sst [smem:[#allocation10]] [#allocation7]
    $region37: #{_game_step.1} parent=1 // pred_fallthru
      _
    %48 = shalt.err (0)
    %s50 = sshll.u32 [#allocation2], 4
    %s51 = int_to_ptr.vmem [resolvable:$true] %s50
    %53 = dma.hbm_to_vmem [thread:$0]  %s6, 9216, %s51, [#allocation3]
    %v54 = vld [vmem:[%s1] sm:$0xff]
    %v55 = vpack.c.bf16 %v54, %v54
    %v56 = vld [vmem:[#allocation5] sm:$0xff]
    %v57 = vld [vmem:[#allocation5 + $0x8] sm:$0xff]
    %v58 = vld [vmem:[#allocation5 + $0x10] sm:$0xff]
    %v59 = vld [vmem:[#allocation5 + $0x18] sm:$0xff]
    %v60 = vld [vmem:[#allocation5 + $0x20] sm:$0xff]
    %v61 = vld [vmem:[#allocation5 + $0x28] sm:$0xff]
    %v62 = vld [vmem:[#allocation5 + $0x30] sm:$0xff]
    %v63 = vld [vmem:[#allocation5 + $0x38] sm:$0xff]
    %v64 = vld [vmem:[#allocation5 + $0x40] sm:$0xff]
    %v65 = vld [vmem:[#allocation5 + $0x48] sm:$0xff]
    %v66 = vld [vmem:[#allocation5 + $0x50] sm:$0xff]
    %v67 = vld [vmem:[#allocation5 + $0x58] sm:$0xff]
    %v68 = vld [vmem:[#allocation5 + $0x60] sm:$0xff]
    %v69 = vld [vmem:[#allocation5 + $0x68] sm:$0xff]
    %v70 = vld [vmem:[#allocation5 + $0x70] sm:$0xff]
    %v71 = vld [vmem:[#allocation5 + $0x78] sm:$0xff]
    %v72 = vld [vmem:[#allocation5 + $0x80] sm:$0xff]
    %v73 = vld [vmem:[#allocation5 + $0x88] sm:$0xff]
    %v74 = vld [vmem:[#allocation5 + $0x90] sm:$0xff]
    %v75 = vld [vmem:[#allocation5 + $0x98] sm:$0xff]
    %v76 = vld [vmem:[#allocation5 + $0xa0] sm:$0xff]
    %v77 = vld [vmem:[#allocation5 + $0xa8] sm:$0xff]
    %v78 = vld [vmem:[#allocation5 + $0xb0] sm:$0xff]
    %v79 = vld [vmem:[#allocation5 + $0xb8] sm:$0xff]
    %v80 = vld [vmem:[#allocation5 + $0xc0] sm:$0xff]
    %v81 = vld [vmem:[#allocation5 + $0xc8] sm:$0xff]
    %v82 = vld [vmem:[#allocation5 + $0xd0] sm:$0xff]
    %v83 = vld [vmem:[#allocation5 + $0xd8] sm:$0xff]
    %v84 = vld [vmem:[#allocation5 + $0xe0] sm:$0xff]
    %v85 = vld [vmem:[#allocation5 + $0xe8] sm:$0xff]
    %v86 = vld [vmem:[#allocation5 + $0xf0] sm:$0xff]
    %v87 = vld [vmem:[#allocation5 + $0xf8] sm:$0xff]
    %v88 = vld [vmem:[#allocation5 + $0x100] sm:$0xff]
    %v89 = vld [vmem:[#allocation5 + $0x108] sm:$0xff]
    %v90 = vld [vmem:[#allocation5 + $0x110] sm:$0xff]
    %v91 = vld [vmem:[#allocation5 + $0x118] sm:$0xff]
    %v92 = vld [vmem:[#allocation5 + $0x120] sm:$0xff]
    %v93 = vld [vmem:[#allocation5 + $0x128] sm:$0xff]
    %v94 = vld [vmem:[#allocation5 + $0x130] sm:$0xff]
    %v95 = vld [vmem:[#allocation5 + $0x138] sm:$0xff]
    %v96 = vld [vmem:[#allocation5 + $0x140] sm:$0xff]
    %v97 = vld [vmem:[#allocation5 + $0x148] sm:$0xff]
    %v98 = vld [vmem:[#allocation5 + $0x150] sm:$0xff]
    %v99 = vld [vmem:[#allocation5 + $0x158] sm:$0xff]
    %v100 = vld [vmem:[#allocation5 + $0x160] sm:$0xff]
    %v101 = vld [vmem:[#allocation5 + $0x168] sm:$0xff]
    %v102 = vld [vmem:[#allocation5 + $0x170] sm:$0xff]
    %v103 = vld [vmem:[#allocation5 + $0x178] sm:$0xff]
    %v104 = vld [vmem:[#allocation5 + $0x180] sm:$0xff]
    %v105 = vld [vmem:[#allocation5 + $0x188] sm:$0xff]
    %v106 = vld [vmem:[#allocation5 + $0x190] sm:$0xff]
    %v107 = vld [vmem:[#allocation5 + $0x198] sm:$0xff]
    %v108 = vld [vmem:[#allocation5 + $0x1a0] sm:$0xff]
    %v109 = vld [vmem:[#allocation5 + $0x1a8] sm:$0xff]
    %v110 = vld [vmem:[#allocation5 + $0x1b0] sm:$0xff]
    %v111 = vld [vmem:[#allocation5 + $0x1b8] sm:$0xff]
    %v112 = vld [vmem:[#allocation5 + $0x1c0] sm:$0xff]
    %v113 = vld [vmem:[#allocation5 + $0x1c8] sm:$0xff]
    %v114 = vld [vmem:[#allocation5 + $0x1d0] sm:$0xff]
    %v115 = vld [vmem:[#allocation5 + $0x1d8] sm:$0xff]
    %v116 = vld [vmem:[#allocation5 + $0x1e0] sm:$0xff]
    %v117 = vld [vmem:[#allocation5 + $0x1e8] sm:$0xff]
    %v118 = vld [vmem:[#allocation5 + $0x1f0] sm:$0xff]
    %v119 = vld [vmem:[#allocation5 + $0x1f8] sm:$0xff]
    %v120 = vld [vmem:[%s3] sm:$0xff]
    %v122 = vlaneseq
    %v123 = vshrl.u32 %v122, 7
    %v124 = vsub.s32 0, %v123
    %v125 = vrot.slane %v120, %v124
    %v126 = vlaneseq
    %v127 = vshrl.u32 %v126, 7
    %v128 = vsub.s32 1, %v127
    %v129 = vrot.slane %v120, %v128
    %v130 = vlaneseq
    %v131 = vshrl.u32 %v130, 7
    %v132 = vsub.s32 2, %v131
    %v133 = vrot.slane %v120, %v132
    %v134 = vlaneseq
    %v135 = vshrl.u32 %v134, 7
    %v136 = vsub.s32 3, %v135
    %v137 = vrot.slane %v120, %v136
    %v138 = vlaneseq
    %v139 = vshrl.u32 %v138, 7
    %v140 = vsub.s32 4, %v139
    %v141 = vrot.slane %v120, %v140
    %v142 = vlaneseq
    %v143 = vshrl.u32 %v142, 7
    %v144 = vsub.s32 5, %v143
    %v145 = vrot.slane %v120, %v144
    %v146 = vlaneseq
    %v147 = vshrl.u32 %v146, 7
    %v148 = vsub.s32 6, %v147
    %v149 = vrot.slane %v120, %v148
    %v150 = vlaneseq
    %v151 = vshrl.u32 %v150, 7
    %v152 = vsub.s32 7, %v151
    %v153 = vrot.slane %v120, %v152
    %v226 = vunpack.c.l.b16 %v56
    %v227 = vunpack.c.h.b16 %v56
    %v228 = vunpack.c.l.b16 %v57
    %v229 = vunpack.c.h.b16 %v57
    %v230 = vunpack.c.l.b16 %v58
    %v231 = vunpack.c.h.b16 %v58
    %v232 = vunpack.c.l.b16 %v59
    %v233 = vunpack.c.h.b16 %v59
    %v234 = vunpack.c.l.b16 %v60
    %v235 = vunpack.c.h.b16 %v60
    %v236 = vunpack.c.l.b16 %v61
    %v237 = vunpack.c.h.b16 %v61
    %v238 = vunpack.c.l.b16 %v62
    %v239 = vunpack.c.h.b16 %v62
    %v240 = vunpack.c.l.b16 %v63
    %v241 = vunpack.c.h.b16 %v63
    %v242 = vunpack.c.l.b16 %v64
    %v243 = vunpack.c.h.b16 %v64
    %v244 = vunpack.c.l.b16 %v65
    %v245 = vunpack.c.h.b16 %v65
    %v246 = vunpack.c.l.b16 %v66
    %v247 = vunpack.c.h.b16 %v66
    %v248 = vunpack.c.l.b16 %v67
    %v249 = vunpack.c.h.b16 %v67
    %v250 = vunpack.c.l.b16 %v68
    %v251 = vunpack.c.h.b16 %v68
    %v252 = vunpack.c.l.b16 %v69
    %v253 = vunpack.c.h.b16 %v69
    %v254 = vunpack.c.l.b16 %v70
    %v255 = vunpack.c.h.b16 %v70
    %v256 = vunpack.c.l.b16 %v71
    %v257 = vunpack.c.h.b16 %v71
    %v258 = vunpack.c.l.b16 %v72
    %v259 = vunpack.c.h.b16 %v72
    %v260 = vunpack.c.l.b16 %v73
    %v261 = vunpack.c.h.b16 %v73
    %v262 = vunpack.c.l.b16 %v74
    %v263 = vunpack.c.h.b16 %v74
    %v264 = vunpack.c.l.b16 %v75
    %v265 = vunpack.c.h.b16 %v75
    %v266 = vunpack.c.l.b16 %v76
    %v267 = vunpack.c.h.b16 %v76
    %v268 = vunpack.c.l.b16 %v77
    %v269 = vunpack.c.h.b16 %v77
    %v270 = vunpack.c.l.b16 %v78
    %v271 = vunpack.c.h.b16 %v78
    %v272 = vunpack.c.l.b16 %v79
    %v273 = vunpack.c.h.b16 %v79
    %v274 = vunpack.c.l.b16 %v80
    %v275 = vunpack.c.h.b16 %v80
    %v276 = vunpack.c.l.b16 %v81
    %v277 = vunpack.c.h.b16 %v81
    %v278 = vunpack.c.l.b16 %v82
    %v279 = vunpack.c.h.b16 %v82
    %v280 = vunpack.c.l.b16 %v83
    %v281 = vunpack.c.h.b16 %v83
    %v282 = vunpack.c.l.b16 %v84
    %v283 = vunpack.c.h.b16 %v84
    %v284 = vunpack.c.l.b16 %v85
    %v285 = vunpack.c.h.b16 %v85
    %v286 = vunpack.c.l.b16 %v86
    %v287 = vunpack.c.h.b16 %v86
    %v288 = vunpack.c.l.b16 %v87
    %v289 = vunpack.c.h.b16 %v87
    %v290 = vunpack.c.l.b16 %v88
    %v291 = vunpack.c.h.b16 %v88
    %v292 = vunpack.c.l.b16 %v89
    %v293 = vunpack.c.h.b16 %v89
    %v294 = vunpack.c.l.b16 %v90
    %v295 = vunpack.c.h.b16 %v90
    %v296 = vunpack.c.l.b16 %v91
    %v297 = vunpack.c.h.b16 %v91
    %v298 = vunpack.c.l.b16 %v92
    %v299 = vunpack.c.h.b16 %v92
    %v300 = vunpack.c.l.b16 %v93
    %v301 = vunpack.c.h.b16 %v93
    %v302 = vunpack.c.l.b16 %v94
    %v303 = vunpack.c.h.b16 %v94
    %v304 = vunpack.c.l.b16 %v95
    %v305 = vunpack.c.h.b16 %v95
    %v306 = vunpack.c.l.b16 %v96
    %v307 = vunpack.c.h.b16 %v96
    %v308 = vunpack.c.l.b16 %v97
    %v309 = vunpack.c.h.b16 %v97
    %v310 = vunpack.c.l.b16 %v98
    %v311 = vunpack.c.h.b16 %v98
    %v312 = vunpack.c.l.b16 %v99
    %v313 = vunpack.c.h.b16 %v99
    %v314 = vunpack.c.l.b16 %v100
    %v315 = vunpack.c.h.b16 %v100
    %v316 = vunpack.c.l.b16 %v101
    %v317 = vunpack.c.h.b16 %v101
    %v318 = vunpack.c.l.b16 %v102
    %v319 = vunpack.c.h.b16 %v102
    %v320 = vunpack.c.l.b16 %v103
    %v321 = vunpack.c.h.b16 %v103
    %v322 = vunpack.c.l.b16 %v104
    %v323 = vunpack.c.h.b16 %v104
    %v324 = vunpack.c.l.b16 %v105
    %v325 = vunpack.c.h.b16 %v105
    %v326 = vunpack.c.l.b16 %v106
    %v327 = vunpack.c.h.b16 %v106
    %v328 = vunpack.c.l.b16 %v107
    %v329 = vunpack.c.h.b16 %v107
    %v330 = vunpack.c.l.b16 %v108
    %v331 = vunpack.c.h.b16 %v108
    %v332 = vunpack.c.l.b16 %v109
    %v333 = vunpack.c.h.b16 %v109
    %v334 = vunpack.c.l.b16 %v110
    %v335 = vunpack.c.h.b16 %v110
    %v336 = vunpack.c.l.b16 %v111
    %v337 = vunpack.c.h.b16 %v111
    %v338 = vunpack.c.l.b16 %v112
    %v339 = vunpack.c.h.b16 %v112
    %v340 = vunpack.c.l.b16 %v113
    %v341 = vunpack.c.h.b16 %v113
    %v342 = vunpack.c.l.b16 %v114
    %v343 = vunpack.c.h.b16 %v114
    %v344 = vunpack.c.l.b16 %v115
    %v345 = vunpack.c.h.b16 %v115
    %v346 = vunpack.c.l.b16 %v116
    %v347 = vunpack.c.h.b16 %v116
    %v348 = vunpack.c.l.b16 %v117
    %v349 = vunpack.c.h.b16 %v117
    %v350 = vunpack.c.l.b16 %v118
    %v351 = vunpack.c.h.b16 %v118
    %v352 = vunpack.c.l.b16 %v119
    %v353 = vunpack.c.h.b16 %v119
    %v354 = vpack.c.b16 %v234, %v226
    %v355 = vpack.c.b16 %v235, %v227
    %v356 = vpack.c.b16 %v236, %v228
    %v357 = vpack.c.b16 %v237, %v229
    %v358 = vpack.c.b16 %v238, %v230
    %v359 = vpack.c.b16 %v239, %v231
    %v360 = vpack.c.b16 %v240, %v232
    %v361 = vpack.c.b16 %v241, %v233
    %v362 = vpack.c.b16 %v250, %v242
    %v363 = vpack.c.b16 %v251, %v243
    %v364 = vpack.c.b16 %v252, %v244
    %v365 = vpack.c.b16 %v253, %v245
    %v366 = vpack.c.b16 %v254, %v246
    %v367 = vpack.c.b16 %v255, %v247
    %v368 = vpack.c.b16 %v256, %v248
    %v369 = vpack.c.b16 %v257, %v249
    %v370 = vpack.c.b16 %v266, %v258
    %v371 = vpack.c.b16 %v267, %v259
    %v372 = vpack.c.b16 %v268, %v260
    %v373 = vpack.c.b16 %v269, %v261
    %v374 = vpack.c.b16 %v270, %v262
    %v375 = vpack.c.b16 %v271, %v263
    %v376 = vpack.c.b16 %v272, %v264
    %v377 = vpack.c.b16 %v273, %v265
    %v378 = vpack.c.b16 %v282, %v274
    %v379 = vpack.c.b16 %v283, %v275
    %v380 = vpack.c.b16 %v284, %v276
    %v381 = vpack.c.b16 %v285, %v277
    %v382 = vpack.c.b16 %v286, %v278
    %v383 = vpack.c.b16 %v287, %v279
    %v384 = vpack.c.b16 %v288, %v280
    %v385 = vpack.c.b16 %v289, %v281
    %v386 = vpack.c.b16 %v298, %v290
    %v387 = vpack.c.b16 %v299, %v291
    %v388 = vpack.c.b16 %v300, %v292
    %v389 = vpack.c.b16 %v301, %v293
    %v390 = vpack.c.b16 %v302, %v294
    %v391 = vpack.c.b16 %v303, %v295
    %v392 = vpack.c.b16 %v304, %v296
    %v393 = vpack.c.b16 %v305, %v297
    %v394 = vpack.c.b16 %v314, %v306
    %v395 = vpack.c.b16 %v315, %v307
    %v396 = vpack.c.b16 %v316, %v308
    %v397 = vpack.c.b16 %v317, %v309
    %v398 = vpack.c.b16 %v318, %v310
    %v399 = vpack.c.b16 %v319, %v311
    %v400 = vpack.c.b16 %v320, %v312
    %v401 = vpack.c.b16 %v321, %v313
    %v402 = vpack.c.b16 %v330, %v322
    %v403 = vpack.c.b16 %v331, %v323
    %v404 = vpack.c.b16 %v332, %v324
    %v405 = vpack.c.b16 %v333, %v325
    %v406 = vpack.c.b16 %v334, %v326
    %v407 = vpack.c.b16 %v335, %v327
    %v408 = vpack.c.b16 %v336, %v328
    %v409 = vpack.c.b16 %v337, %v329
    %v410 = vpack.c.b16 %v346, %v338
    %v411 = vpack.c.b16 %v347, %v339
    %v412 = vpack.c.b16 %v348, %v340
    %v413 = vpack.c.b16 %v349, %v341
    %v414 = vpack.c.b16 %v350, %v342
    %v415 = vpack.c.b16 %v351, %v343
    %v416 = vpack.c.b16 %v352, %v344
    %v417 = vpack.c.b16 %v353, %v345
    %482 = vmatprep.subr.bf16.mxu0 %v355
    %483 = vmatpush1.bf16.msra.mxu0 %v354
    %484 = vmatprep.subr.bf16.mxu0 %v363
    %485 = vmatpush1.bf16.msra.mxu0 %v362
    %486 = vmatprep.subr.bf16.mxu0 %v371
    %487 = vmatpush1.bf16.msra.mxu0 %v370
    %488 = vmatprep.subr.bf16.mxu0 %v379
    %489 = vmatpush1.bf16.msra.mxu0 %v378
    %490 = vmatprep.subr.bf16.mxu0 %v387
    %491 = vmatpush1.bf16.msra.mxu0 %v386
    %492 = vmatprep.subr.bf16.mxu0 %v395
    %493 = vmatpush1.bf16.msra.mxu0 %v394
    %494 = vmatprep.subr.bf16.mxu0 %v403
    %495 = vmatpush1.bf16.msra.mxu0 %v402
    %496 = vmatprep.subr.bf16.mxu0 %v411
    %497 = vmatpush1.bf16.msra.mxu0 %v410
    %498 = vmatprep.subr.bf16.mxu0 0
    %499 = vmatpush1.bf16.msra.mxu0 0
    %500 = vmatprep.subr.bf16.mxu0 0
    %501 = vmatpush1.bf16.msra.mxu0 0
    %502 = vmatprep.subr.bf16.mxu0 0
    %503 = vmatpush1.bf16.msra.mxu0 0
    %504 = vmatprep.subr.bf16.mxu0 0
    %505 = vmatpush1.bf16.msra.mxu0 0
    %506 = vmatprep.subr.bf16.mxu0 0
    %507 = vmatpush1.bf16.msra.mxu0 0
    %508 = vmatprep.subr.bf16.mxu0 0
    %509 = vmatpush1.bf16.msra.mxu0 0
    %510 = vmatprep.subr.bf16.mxu0 0
    %511 = vmatpush1.bf16.msra.mxu0 0
    %512 = vmatprep.subr.bf16.mxu0 0
    %513 = vmatpush1.bf16.msra.mxu0 0
    %514 = vmatprep.mubr.bf16.mxu0 0
    %515 = vmatmul.mubr.bf16.gmra.mrb[0].mxu0 %v55
    %v516 = vpop.f32.mrb[0].mxu0
    %v517 = vadd.f32 %v125, %v516
    %v518 = vpop.f32.mrb[0].mxu0
    %v519 = vadd.f32 %v129, %v518
    %v520 = vpop.f32.mrb[0].mxu0
    %v521 = vpop.f32.mrb[0].mxu0
    %522 = vdwg.mxu0
    %523 = vmatprep.subr.bf16.mxu0 %v357
    %524 = vmatpush1.bf16.msra.mxu0 %v356
    %525 = vmatprep.subr.bf16.mxu0 %v365
    %526 = vmatpush1.bf16.msra.mxu0 %v364
    %527 = vmatprep.subr.bf16.mxu0 %v373
    %528 = vmatpush1.bf16.msra.mxu0 %v372
    %529 = vmatprep.subr.bf16.mxu0 %v381
    %530 = vmatpush1.bf16.msra.mxu0 %v380
    %531 = vmatprep.subr.bf16.mxu0 %v389
    %532 = vmatpush1.bf16.msra.mxu0 %v388
    %533 = vmatprep.subr.bf16.mxu0 %v397
    %534 = vmatpush1.bf16.msra.mxu0 %v396
    %535 = vmatprep.subr.bf16.mxu0 %v405
    %536 = vmatpush1.bf16.msra.mxu0 %v404
    %537 = vmatprep.subr.bf16.mxu0 %v413
    %538 = vmatpush1.bf16.msra.mxu0 %v412
    %539 = vmatprep.subr.bf16.mxu0 0
    %540 = vmatpush1.bf16.msra.mxu0 0
    %541 = vmatprep.subr.bf16.mxu0 0
    %542 = vmatpush1.bf16.msra.mxu0 0
    %543 = vmatprep.subr.bf16.mxu0 0
    %544 = vmatpush1.bf16.msra.mxu0 0
    %545 = vmatprep.subr.bf16.mxu0 0
    %546 = vmatpush1.bf16.msra.mxu0 0
    %547 = vmatprep.subr.bf16.mxu0 0
    %548 = vmatpush1.bf16.msra.mxu0 0
    %549 = vmatprep.subr.bf16.mxu0 0
    %550 = vmatpush1.bf16.msra.mxu0 0
    %551 = vmatprep.subr.bf16.mxu0 0
    %552 = vmatpush1.bf16.msra.mxu0 0
    %553 = vmatprep.subr.bf16.mxu0 0
    %554 = vmatpush1.bf16.msra.mxu0 0
    %555 = vmatprep.mubr.bf16.mxu0 0
    %556 = vmatmul.mubr.bf16.gmra.mrb[0].mxu0 %v55
    %v557 = vpop.f32.mrb[0].mxu0
    %v558 = vadd.f32 %v133, %v557
    %v559 = vpop.f32.mrb[0].mxu0
    %v560 = vadd.f32 %v137, %v559
    %v561 = vpop.f32.mrb[0].mxu0
    %v562 = vpop.f32.mrb[0].mxu0
    %563 = vdwg.mxu0
    %564 = vmatprep.subr.bf16.mxu0 %v359
    %565 = vmatpush1.bf16.msra.mxu0 %v358
    %566 = vmatprep.subr.bf16.mxu0 %v367
    %567 = vmatpush1.bf16.msra.mxu0 %v366
    %568 = vmatprep.subr.bf16.mxu0 %v375
    %569 = vmatpush1.bf16.msra.mxu0 %v374
    %570 = vmatprep.subr.bf16.mxu0 %v383
    %571 = vmatpush1.bf16.msra.mxu0 %v382
    %572 = vmatprep.subr.bf16.mxu0 %v391
    %573 = vmatpush1.bf16.msra.mxu0 %v390
    %574 = vmatprep.subr.bf16.mxu0 %v399
    %575 = vmatpush1.bf16.msra.mxu0 %v398
    %576 = vmatprep.subr.bf16.mxu0 %v407
    %577 = vmatpush1.bf16.msra.mxu0 %v406
    %578 = vmatprep.subr.bf16.mxu0 %v415
    %579 = vmatpush1.bf16.msra.mxu0 %v414
    %580 = vmatprep.subr.bf16.mxu0 0
    %581 = vmatpush1.bf16.msra.mxu0 0
    %582 = vmatprep.subr.bf16.mxu0 0
    %583 = vmatpush1.bf16.msra.mxu0 0
    %584 = vmatprep.subr.bf16.mxu0 0
    %585 = vmatpush1.bf16.msra.mxu0 0
    %586 = vmatprep.subr.bf16.mxu0 0
    %587 = vmatpush1.bf16.msra.mxu0 0
    %588 = vmatprep.subr.bf16.mxu0 0
    %589 = vmatpush1.bf16.msra.mxu0 0
    %590 = vmatprep.subr.bf16.mxu0 0
    %591 = vmatpush1.bf16.msra.mxu0 0
    %592 = vmatprep.subr.bf16.mxu0 0
    %593 = vmatpush1.bf16.msra.mxu0 0
    %594 = vmatprep.subr.bf16.mxu0 0
    %595 = vmatpush1.bf16.msra.mxu0 0
    %596 = vmatprep.mubr.bf16.mxu0 0
    %597 = vmatmul.mubr.bf16.gmra.mrb[0].mxu0 %v55
    %v598 = vpop.f32.mrb[0].mxu0
    %v599 = vadd.f32 %v141, %v598
    %v600 = vpop.f32.mrb[0].mxu0
    %v601 = vadd.f32 %v145, %v600
    %v602 = vpop.f32.mrb[0].mxu0
    %v603 = vpop.f32.mrb[0].mxu0
    %604 = vdwg.mxu0
    %605 = vmatprep.subr.bf16.mxu0 %v361
    %606 = vmatpush1.bf16.msra.mxu0 %v360
    %607 = vmatprep.subr.bf16.mxu0 %v369
    %608 = vmatpush1.bf16.msra.mxu0 %v368
    %609 = vmatprep.subr.bf16.mxu0 %v377
    %610 = vmatpush1.bf16.msra.mxu0 %v376
    %611 = vmatprep.subr.bf16.mxu0 %v385
    %612 = vmatpush1.bf16.msra.mxu0 %v384
    %613 = vmatprep.subr.bf16.mxu0 %v393
    %614 = vmatpush1.bf16.msra.mxu0 %v392
    %615 = vmatprep.subr.bf16.mxu0 %v401
    %616 = vmatpush1.bf16.msra.mxu0 %v400
    %617 = vmatprep.subr.bf16.mxu0 %v409
    %618 = vmatpush1.bf16.msra.mxu0 %v408
    %619 = vmatprep.subr.bf16.mxu0 %v417
    %620 = vmatpush1.bf16.msra.mxu0 %v416
    %621 = vmatprep.subr.bf16.mxu0 0
    %622 = vmatpush1.bf16.msra.mxu0 0
    %623 = vmatprep.subr.bf16.mxu0 0
    %624 = vmatpush1.bf16.msra.mxu0 0
    %625 = vmatprep.subr.bf16.mxu0 0
    %626 = vmatpush1.bf16.msra.mxu0 0
    %627 = vmatprep.subr.bf16.mxu0 0
    %628 = vmatpush1.bf16.msra.mxu0 0
    %629 = vmatprep.subr.bf16.mxu0 0
    %630 = vmatpush1.bf16.msra.mxu0 0
    %631 = vmatprep.subr.bf16.mxu0 0
    %632 = vmatpush1.bf16.msra.mxu0 0
    %633 = vmatprep.subr.bf16.mxu0 0
    %634 = vmatpush1.bf16.msra.mxu0 0
    %635 = vmatprep.subr.bf16.mxu0 0
    %636 = vmatpush1.bf16.msra.mxu0 0
    %637 = vmatprep.mubr.bf16.mxu0 0
    %638 = vmatmul.mubr.bf16.gmra.mrb[0].mxu0 %v55
    %v639 = vpop.f32.mrb[0].mxu0
    %v640 = vadd.f32 %v149, %v639
    %v641 = vpop.f32.mrb[0].mxu0
    %v642 = vadd.f32 %v153, %v641
    %v643 = vpop.f32.mrb[0].mxu0
    %v644 = vpop.f32.mrb[0].mxu0
    %645 = vdwg.mxu0
    %646 = vmax.xlane.f32.xlu0 %v517
    %v647 = vpop.xlane.xlu0 %646
    %v648 = vsub.f32 %v517, %v647
    %v649 = vmul.f32 %v648, 1.442695
    %v650 = vpow.pop %v649
    %651 = vadd.xlane.f32.xlu0 %v650
    %v652 = vpop.xlane.xlu0 %651
    %v653 = vlog2.pop %v652
    %v654 = vmul.f32 %v653, 0.6931472
    %v655 = vsub.f32 0.0, %v654
    %v656 = vadd.f32 %v647, %v654
    %v657 = vmul.f32 %v650, %v517
    %658 = vadd.xlane.f32.xlu0 %v657
    %v659 = vpop.xlane.xlu0 %658
    %v660 = vrcp.pop %v652
    %v661 = vmul.f32 %v659, %v660
    %v662 = vsub.f32 %v656, %v661
    %v663 = vadd.f32 %v662, 0.0
    %vm664 = vcmp.eq.f32.partialorder %v517, %v647
    %v665 = vsel %vm664, 1, 0
    %v666 = vcvt.s32.f32 %v665
    %v667 = vpack.c.bf16 %v666, %v666
    %668 = vmax.xlane.f32.xlu0 %v519
    %v669 = vpop.xlane.xlu0 %668
    %v670 = vsub.f32 %v519, %v669
    %v671 = vmul.f32 %v670, 1.442695
    %v672 = vpow.pop %v671
    %673 = vadd.xlane.f32.xlu0 %v672
    %v674 = vpop.xlane.xlu0 %673
    %v675 = vlog2.pop %v674
    %v676 = vmul.f32 %v675, 0.6931472
    %v677 = vsub.f32 %v655, %v676
    %v678 = vadd.f32 %v669, %v676
    %v679 = vmul.f32 %v672, %v519
    %680 = vadd.xlane.f32.xlu0 %v679
    %v681 = vpop.xlane.xlu0 %680
    %v682 = vrcp.pop %v674
    %v683 = vmul.f32 %v681, %v682
    %v684 = vsub.f32 %v678, %v683
    %v685 = vadd.f32 %v663, %v684
    %vm686 = vcmp.eq.f32.partialorder %v519, %v669
    %v687 = vsel %vm686, 1, 0
    %v688 = vcvt.s32.f32 %v687
    %v689 = vpack.c.bf16 %v688, %v688
    %690 = vmax.xlane.f32.xlu0 %v558
    %v691 = vpop.xlane.xlu0 %690
    %v692 = vsub.f32 %v558, %v691
    %v693 = vmul.f32 %v692, 1.442695
    %v694 = vpow.pop %v693
    %695 = vadd.xlane.f32.xlu0 %v694
    %v696 = vpop.xlane.xlu0 %695
    %v697 = vlog2.pop %v696
    %v698 = vmul.f32 %v697, 0.6931472
    %v699 = vsub.f32 %v677, %v698
    %v700 = vadd.f32 %v691, %v698
    %v701 = vmul.f32 %v694, %v558
    %702 = vadd.xlane.f32.xlu0 %v701
    %v703 = vpop.xlane.xlu0 %702
    %v704 = vrcp.pop %v696
    %v705 = vmul.f32 %v703, %v704
    %v706 = vsub.f32 %v700, %v705
    %v707 = vadd.f32 %v685, %v706
    %vm708 = vcmp.eq.f32.partialorder %v558, %v691
    %v709 = vsel %vm708, 1, 0
    %v710 = vcvt.s32.f32 %v709
    %v711 = vpack.c.bf16 %v710, %v710
    %712 = vmax.xlane.f32.xlu0 %v560
    %v713 = vpop.xlane.xlu0 %712
    %v714 = vsub.f32 %v560, %v713
    %v715 = vmul.f32 %v714, 1.442695
    %v716 = vpow.pop %v715
    %717 = vadd.xlane.f32.xlu0 %v716
    %v718 = vpop.xlane.xlu0 %717
    %v719 = vlog2.pop %v718
    %v720 = vmul.f32 %v719, 0.6931472
    %v721 = vsub.f32 %v699, %v720
    %v722 = vadd.f32 %v713, %v720
    %v723 = vmul.f32 %v716, %v560
    %724 = vadd.xlane.f32.xlu0 %v723
    %v725 = vpop.xlane.xlu0 %724
    %v726 = vrcp.pop %v718
    %v727 = vmul.f32 %v725, %v726
    %v728 = vsub.f32 %v722, %v727
    %v729 = vadd.f32 %v707, %v728
    %vm730 = vcmp.eq.f32.partialorder %v560, %v713
    %v731 = vsel %vm730, 1, 0
    %v732 = vcvt.s32.f32 %v731
    %v733 = vpack.c.bf16 %v732, %v732
    %734 = vmax.xlane.f32.xlu0 %v599
    %v735 = vpop.xlane.xlu0 %734
    %v736 = vsub.f32 %v599, %v735
    %v737 = vmul.f32 %v736, 1.442695
    %v738 = vpow.pop %v737
    %739 = vadd.xlane.f32.xlu0 %v738
    %v740 = vpop.xlane.xlu0 %739
    %v741 = vlog2.pop %v740
    %v742 = vmul.f32 %v741, 0.6931472
    %v743 = vsub.f32 %v721, %v742
    %v744 = vadd.f32 %v735, %v742
    %v745 = vmul.f32 %v738, %v599
    %746 = vadd.xlane.f32.xlu0 %v745
    %v747 = vpop.xlane.xlu0 %746
    %v748 = vrcp.pop %v740
    %v749 = vmul.f32 %v747, %v748
    %v750 = vsub.f32 %v744, %v749
    %v751 = vadd.f32 %v729, %v750
    %vm752 = vcmp.eq.f32.partialorder %v599, %v735
    %v753 = vsel %vm752, 1, 0
    %v754 = vcvt.s32.f32 %v753
    %v755 = vpack.c.bf16 %v754, %v754
    %756 = vmax.xlane.f32.xlu0 %v601
    %v757 = vpop.xlane.xlu0 %756
    %v758 = vsub.f32 %v601, %v757
    %v759 = vmul.f32 %v758, 1.442695
    %v760 = vpow.pop %v759
    %761 = vadd.xlane.f32.xlu0 %v760
    %v762 = vpop.xlane.xlu0 %761
    %v763 = vlog2.pop %v762
    %v764 = vmul.f32 %v763, 0.6931472
    %v765 = vsub.f32 %v743, %v764
    %v766 = vadd.f32 %v757, %v764
    %v767 = vmul.f32 %v760, %v601
    %768 = vadd.xlane.f32.xlu0 %v767
    %v769 = vpop.xlane.xlu0 %768
    %v770 = vrcp.pop %v762
    %v771 = vmul.f32 %v769, %v770
    %v772 = vsub.f32 %v766, %v771
    %v773 = vadd.f32 %v751, %v772
    %vm774 = vcmp.eq.f32.partialorder %v601, %v757
    %v775 = vsel %vm774, 1, 0
    %v776 = vcvt.s32.f32 %v775
    %v777 = vpack.c.bf16 %v776, %v776
    %778 = vmax.xlane.f32.xlu0 %v640
    %v779 = vpop.xlane.xlu0 %778
    %v780 = vsub.f32 %v640, %v779
    %v781 = vmul.f32 %v780, 1.442695
    %v782 = vpow.pop %v781
    %783 = vadd.xlane.f32.xlu0 %v782
    %v784 = vpop.xlane.xlu0 %783
    %v785 = vlog2.pop %v784
    %v786 = vmul.f32 %v785, 0.6931472
    %v787 = vsub.f32 %v765, %v786
    %v788 = vadd.f32 %v779, %v786
    %v789 = vmul.f32 %v782, %v640
    %790 = vadd.xlane.f32.xlu0 %v789
    %v791 = vpop.xlane.xlu0 %790
    %v792 = vrcp.pop %v784
    %v793 = vmul.f32 %v791, %v792
    %v794 = vsub.f32 %v788, %v793
    %v795 = vadd.f32 %v773, %v794
    %vm796 = vcmp.eq.f32.partialorder %v640, %v779
    %v797 = vsel %vm796, 1, 0
    %v798 = vcvt.s32.f32 %v797
    %v799 = vpack.c.bf16 %v798, %v798
    %800 = vmax.xlane.f32.xlu0 %v642
    %v801 = vpop.xlane.xlu0 %800
    %v802 = vsub.f32 %v642, %v801
    %v803 = vmul.f32 %v802, 1.442695
    %v804 = vpow.pop %v803
    %805 = vadd.xlane.f32.xlu0 %v804
    %v806 = vpop.xlane.xlu0 %805
    %v807 = vlog2.pop %v806
    %v808 = vmul.f32 %v807, 0.6931472
    %v809 = vsub.f32 %v787, %v808
    %v810 = vadd.f32 %v801, %v808
    %v811 = vmul.f32 %v804, %v642
    %812 = vadd.xlane.f32.xlu0 %v811
    %v813 = vpop.xlane.xlu0 %812
    %v814 = vrcp.pop %v806
    %v815 = vmul.f32 %v813, %v814
    %v816 = vsub.f32 %v810, %v815
    %v817 = vadd.f32 %v795, %v816
    %vm818 = vcmp.eq.f32.partialorder %v642, %v801
    %v819 = vsel %vm818, 1, 0
    %v820 = vcvt.s32.f32 %v819
    %v821 = vpack.c.bf16 %v820, %v820
    %v822 = vld [vmem:[%s5] sm:$0xff]
    %v823 = vpack.c.bf16 %v822, %v822
    %s824 = smul.u32 4, 144
    %s825 = smul.u32 %s824, 1
    %s826 = sshll.u32 %s825, 4
    %827 = dma.done [#allocation3], %s826
    %v828 = vld [vmem:[#allocation2] sm:$0xff]
    %v829 = vld [vmem:[#allocation2 + $0x8] sm:$0xff]
    %v830 = vld [vmem:[#allocation2 + $0x10] sm:$0xff]
    %v831 = vld [vmem:[#allocation2 + $0x18] sm:$0xff]
    %v832 = vld [vmem:[#allocation2 + $0x20] sm:$0xff]
    %v833 = vld [vmem:[#allocation2 + $0x28] sm:$0xff]
    %v834 = vld [vmem:[#allocation2 + $0x30] sm:$0xff]
    %v835 = vld [vmem:[#allocation2 + $0x38] sm:$0xff]
    %v836 = vld [vmem:[#allocation2 + $0x40] sm:$0xff]
    %v837 = vld [vmem:[#allocation2 + $0x48] sm:$0xff]
    %v838 = vld [vmem:[#allocation2 + $0x50] sm:$0xff]
    %v839 = vld [vmem:[#allocation2 + $0x58] sm:$0xff]
    %v840 = vld [vmem:[#allocation2 + $0x60] sm:$0xff]
    %v841 = vld [vmem:[#allocation2 + $0x68] sm:$0xff]
    %v842 = vld [vmem:[#allocation2 + $0x70] sm:$0xff]
    %v843 = vld [vmem:[#allocation2 + $0x78] sm:$0xff]
    %v844 = vld [vmem:[#allocation2 + $0x80] sm:$0xff]
    %v845 = vld [vmem:[#allocation2 + $0x88] sm:$0xff]
    %v846 = vld [vmem:[#allocation2 + $0x90] sm:$0xff]
    %v847 = vld [vmem:[#allocation2 + $0x98] sm:$0xff]
    %v848 = vld [vmem:[#allocation2 + $0xa0] sm:$0xff]
    %v849 = vld [vmem:[#allocation2 + $0xa8] sm:$0xff]
    %v850 = vld [vmem:[#allocation2 + $0xb0] sm:$0xff]
    %v851 = vld [vmem:[#allocation2 + $0xb8] sm:$0xff]
    %v852 = vld [vmem:[#allocation2 + $0xc0] sm:$0xff]
    %v853 = vld [vmem:[#allocation2 + $0xc8] sm:$0xff]
    %v854 = vld [vmem:[#allocation2 + $0xd0] sm:$0xff]
    %v855 = vld [vmem:[#allocation2 + $0xd8] sm:$0xff]
    %v856 = vld [vmem:[#allocation2 + $0xe0] sm:$0xff]
    %v857 = vld [vmem:[#allocation2 + $0xe8] sm:$0xff]
    %v858 = vld [vmem:[#allocation2 + $0xf0] sm:$0xff]
    %v859 = vld [vmem:[#allocation2 + $0xf8] sm:$0xff]
    %v860 = vld [vmem:[#allocation2 + $0x100] sm:$0xff]
    %v861 = vld [vmem:[#allocation2 + $0x108] sm:$0xff]
    %v862 = vld [vmem:[#allocation2 + $0x110] sm:$0xff]
    %v863 = vld [vmem:[#allocation2 + $0x118] sm:$0xff]
    %v864 = vld [vmem:[#allocation2 + $0x120] sm:$0xff]
    %v865 = vld [vmem:[#allocation2 + $0x128] sm:$0xff]
    %v866 = vld [vmem:[#allocation2 + $0x130] sm:$0xff]
    %v867 = vld [vmem:[#allocation2 + $0x138] sm:$0xff]
    %v868 = vld [vmem:[#allocation2 + $0x140] sm:$0xff]
    %v869 = vld [vmem:[#allocation2 + $0x148] sm:$0xff]
    %v870 = vld [vmem:[#allocation2 + $0x150] sm:$0xff]
    %v871 = vld [vmem:[#allocation2 + $0x158] sm:$0xff]
    %v872 = vld [vmem:[#allocation2 + $0x160] sm:$0xff]
    %v873 = vld [vmem:[#allocation2 + $0x168] sm:$0xff]
    %v874 = vld [vmem:[#allocation2 + $0x170] sm:$0xff]
    %v875 = vld [vmem:[#allocation2 + $0x178] sm:$0xff]
    %v876 = vld [vmem:[#allocation2 + $0x180] sm:$0xff]
    %v877 = vld [vmem:[#allocation2 + $0x188] sm:$0xff]
    %v878 = vld [vmem:[#allocation2 + $0x190] sm:$0xff]
    %v879 = vld [vmem:[#allocation2 + $0x198] sm:$0xff]
    %v880 = vld [vmem:[#allocation2 + $0x1a0] sm:$0xff]
    %v881 = vld [vmem:[#allocation2 + $0x1a8] sm:$0xff]
    %v882 = vld [vmem:[#allocation2 + $0x1b0] sm:$0xff]
    %v883 = vld [vmem:[#allocation2 + $0x1b8] sm:$0xff]
    %v884 = vld [vmem:[#allocation2 + $0x1c0] sm:$0xff]
    %v885 = vld [vmem:[#allocation2 + $0x1c8] sm:$0xff]
    %v886 = vld [vmem:[#allocation2 + $0x1d0] sm:$0xff]
    %v887 = vld [vmem:[#allocation2 + $0x1d8] sm:$0xff]
    %v888 = vld [vmem:[#allocation2 + $0x1e0] sm:$0xff]
    %v889 = vld [vmem:[#allocation2 + $0x1e8] sm:$0xff]
    %v890 = vld [vmem:[#allocation2 + $0x1f0] sm:$0xff]
    %v891 = vld [vmem:[#allocation2 + $0x1f8] sm:$0xff]
    %v892 = vld [vmem:[#allocation2 + $0x200] sm:$0xff]
    %v893 = vld [vmem:[#allocation2 + $0x208] sm:$0xff]
    %v894 = vld [vmem:[#allocation2 + $0x210] sm:$0xff]
    %v895 = vld [vmem:[#allocation2 + $0x218] sm:$0xff]
    %v896 = vld [vmem:[#allocation2 + $0x220] sm:$0xff]
    %v897 = vld [vmem:[#allocation2 + $0x228] sm:$0xff]
    %v898 = vld [vmem:[#allocation2 + $0x230] sm:$0xff]
    %v899 = vld [vmem:[#allocation2 + $0x238] sm:$0xff]
    %v900 = vld [vmem:[%s7] sm:$0x1]
    %v902 = vlaneseq
    %v903 = vshrl.u32 %v902, 7
    %v904 = vsub.s32 0, %v903
    %v905 = vrot.slane %v900, %v904
    %907 = vmatprep.subr.bf16.mxu0 0
    %908 = vmatpush1.bf16.msra.mxu0 %v828
    %909 = vmatprep.subr.bf16.mxu0 0
    %910 = vmatpush1.bf16.msra.mxu0 %v829
    %911 = vmatprep.subr.bf16.mxu0 0
    %912 = vmatpush1.bf16.msra.mxu0 %v830
    %913 = vmatprep.subr.bf16.mxu0 0
    %914 = vmatpush1.bf16.msra.mxu0 %v831
    %915 = vmatprep.subr.bf16.mxu0 0
    %916 = vmatpush1.bf16.msra.mxu0 %v832
    %917 = vmatprep.subr.bf16.mxu0 0
    %918 = vmatpush1.bf16.msra.mxu0 %v833
    %919 = vmatprep.subr.bf16.mxu0 0
    %920 = vmatpush1.bf16.msra.mxu0 %v834
    %921 = vmatprep.subr.bf16.mxu0 0
    %922 = vmatpush1.bf16.msra.mxu0 %v835
    %923 = vmatprep.subr.bf16.mxu0 0
    %924 = vmatpush1.bf16.msra.mxu0 %v836
    %925 = vmatprep.subr.bf16.mxu0 0
    %926 = vmatpush1.bf16.msra.mxu0 %v837
    %927 = vmatprep.subr.bf16.mxu0 0
    %928 = vmatpush1.bf16.msra.mxu0 %v838
    %929 = vmatprep.subr.bf16.mxu0 0
    %930 = vmatpush1.bf16.msra.mxu0 %v839
    %931 = vmatprep.subr.bf16.mxu0 0
    %932 = vmatpush1.bf16.msra.mxu0 %v840
    %933 = vmatprep.subr.bf16.mxu0 0
    %934 = vmatpush1.bf16.msra.mxu0 %v841
    %935 = vmatprep.subr.bf16.mxu0 0
    %936 = vmatpush1.bf16.msra.mxu0 %v842
    %937 = vmatprep.subr.bf16.mxu0 0
    %938 = vmatpush1.bf16.msra.mxu0 %v843
    %939 = vmatprep.mubr.bf16.mxu0 %v689
    %940 = vmatmul.mubr.bf16.gmra.mrb[0].mxu0 %v667
    %v941 = vpop.f32.mrb[0].mxu0
    %v942 = vadd.f32 %v905, %v941
    %v943 = vpop.f32.mrb[0].mxu0
    %v944 = vpop.f32.mrb[0].mxu0
    %v945 = vpop.f32.mrb[0].mxu0
    %946 = vdwg.mxu0
    %947 = vmatprep.subr.bf16.mxu0 0
    %948 = vmatpush1.bf16.msra.mxu0 %v844
    %949 = vmatprep.subr.bf16.mxu0 0
    %950 = vmatpush1.bf16.msra.mxu0 %v845
    %951 = vmatprep.subr.bf16.mxu0 0
    %952 = vmatpush1.bf16.msra.mxu0 %v846
    %953 = vmatprep.subr.bf16.mxu0 0
    %954 = vmatpush1.bf16.msra.mxu0 %v847
    %955 = vmatprep.subr.bf16.mxu0 0
    %956 = vmatpush1.bf16.msra.mxu0 %v848
    %957 = vmatprep.subr.bf16.mxu0 0
    %958 = vmatpush1.bf16.msra.mxu0 %v849
    %959 = vmatprep.subr.bf16.mxu0 0
    %960 = vmatpush1.bf16.msra.mxu0 %v850
    %961 = vmatprep.subr.bf16.mxu0 0
    %962 = vmatpush1.bf16.msra.mxu0 %v851
    %963 = vmatprep.subr.bf16.mxu0 0
    %964 = vmatpush1.bf16.msra.mxu0 %v852
    %965 = vmatprep.subr.bf16.mxu0 0
    %966 = vmatpush1.bf16.msra.mxu0 %v853
    %967 = vmatprep.subr.bf16.mxu0 0
    %968 = vmatpush1.bf16.msra.mxu0 %v854
    %969 = vmatprep.subr.bf16.mxu0 0
    %970 = vmatpush1.bf16.msra.mxu0 %v855
    %971 = vmatprep.subr.bf16.mxu0 0
    %972 = vmatpush1.bf16.msra.mxu0 %v856
    %973 = vmatprep.subr.bf16.mxu0 0
    %974 = vmatpush1.bf16.msra.mxu0 %v857
    %975 = vmatprep.subr.bf16.mxu0 0
    %976 = vmatpush1.bf16.msra.mxu0 %v858
    %977 = vmatprep.subr.bf16.mxu0 0
    %978 = vmatpush1.bf16.msra.mxu0 %v859
    %979 = vmatprep.mubr.bf16.mxu0 %v733
    %980 = vmatmul.mubr.bf16.gmra.mrb[0].mxu0 %v711
    %v981 = vpop.f32.mrb[0].mxu0
    %v982 = vadd.f32 %v942, %v981
    %v983 = vpop.f32.mrb[0].mxu0
    %v984 = vpop.f32.mrb[0].mxu0
    %v985 = vpop.f32.mrb[0].mxu0
    %986 = vdwg.mxu0
    %987 = vmatprep.subr.bf16.mxu0 0
    %988 = vmatpush1.bf16.msra.mxu0 %v860
    %989 = vmatprep.subr.bf16.mxu0 0
    %990 = vmatpush1.bf16.msra.mxu0 %v861
    %991 = vmatprep.subr.bf16.mxu0 0
    %992 = vmatpush1.bf16.msra.mxu0 %v862
    %993 = vmatprep.subr.bf16.mxu0 0
    %994 = vmatpush1.bf16.msra.mxu0 %v863
    %995 = vmatprep.subr.bf16.mxu0 0
    %996 = vmatpush1.bf16.msra.mxu0 %v864
    %997 = vmatprep.subr.bf16.mxu0 0
    %998 = vmatpush1.bf16.msra.mxu0 %v865
    %999 = vmatprep.subr.bf16.mxu0 0
    %1000 = vmatpush1.bf16.msra.mxu0 %v866
    %1001 = vmatprep.subr.bf16.mxu0 0
    %1002 = vmatpush1.bf16.msra.mxu0 %v867
    %1003 = vmatprep.subr.bf16.mxu0 0
    %1004 = vmatpush1.bf16.msra.mxu0 %v868
    %1005 = vmatprep.subr.bf16.mxu0 0
    %1006 = vmatpush1.bf16.msra.mxu0 %v869
    %1007 = vmatprep.subr.bf16.mxu0 0
    %1008 = vmatpush1.bf16.msra.mxu0 %v870
    %1009 = vmatprep.subr.bf16.mxu0 0
    %1010 = vmatpush1.bf16.msra.mxu0 %v871
    %1011 = vmatprep.subr.bf16.mxu0 0
    %1012 = vmatpush1.bf16.msra.mxu0 %v872
    %1013 = vmatprep.subr.bf16.mxu0 0
    %1014 = vmatpush1.bf16.msra.mxu0 %v873
    %1015 = vmatprep.subr.bf16.mxu0 0
    %1016 = vmatpush1.bf16.msra.mxu0 %v874
    %1017 = vmatprep.subr.bf16.mxu0 0
    %1018 = vmatpush1.bf16.msra.mxu0 %v875
    %1019 = vmatprep.mubr.bf16.mxu0 %v777
    %1020 = vmatmul.mubr.bf16.gmra.mrb[0].mxu0 %v755
    %v1021 = vpop.f32.mrb[0].mxu0
    %v1022 = vadd.f32 %v982, %v1021
    %v1023 = vpop.f32.mrb[0].mxu0
    %v1024 = vpop.f32.mrb[0].mxu0
    %v1025 = vpop.f32.mrb[0].mxu0
    %1026 = vdwg.mxu0
    %1027 = vmatprep.subr.bf16.mxu0 0
    %1028 = vmatpush1.bf16.msra.mxu0 %v876
    %1029 = vmatprep.subr.bf16.mxu0 0
    %1030 = vmatpush1.bf16.msra.mxu0 %v877
    %1031 = vmatprep.subr.bf16.mxu0 0
    %1032 = vmatpush1.bf16.msra.mxu0 %v878
    %1033 = vmatprep.subr.bf16.mxu0 0
    %1034 = vmatpush1.bf16.msra.mxu0 %v879
    %1035 = vmatprep.subr.bf16.mxu0 0
    %1036 = vmatpush1.bf16.msra.mxu0 %v880
    %1037 = vmatprep.subr.bf16.mxu0 0
    %1038 = vmatpush1.bf16.msra.mxu0 %v881
    %1039 = vmatprep.subr.bf16.mxu0 0
    %1040 = vmatpush1.bf16.msra.mxu0 %v882
    %1041 = vmatprep.subr.bf16.mxu0 0
    %1042 = vmatpush1.bf16.msra.mxu0 %v883
    %1043 = vmatprep.subr.bf16.mxu0 0
    %1044 = vmatpush1.bf16.msra.mxu0 %v884
    %1045 = vmatprep.subr.bf16.mxu0 0
    %1046 = vmatpush1.bf16.msra.mxu0 %v885
    %1047 = vmatprep.subr.bf16.mxu0 0
    %1048 = vmatpush1.bf16.msra.mxu0 %v886
    %1049 = vmatprep.subr.bf16.mxu0 0
    %1050 = vmatpush1.bf16.msra.mxu0 %v887
    %1051 = vmatprep.subr.bf16.mxu0 0
    %1052 = vmatpush1.bf16.msra.mxu0 %v888
    %1053 = vmatprep.subr.bf16.mxu0 0
    %1054 = vmatpush1.bf16.msra.mxu0 %v889
    %1055 = vmatprep.subr.bf16.mxu0 0
    %1056 = vmatpush1.bf16.msra.mxu0 %v890
    %1057 = vmatprep.subr.bf16.mxu0 0
    %1058 = vmatpush1.bf16.msra.mxu0 %v891
    %1059 = vmatprep.mubr.bf16.mxu0 %v821
    %1060 = vmatmul.mubr.bf16.gmra.mrb[0].mxu0 %v799
    %v1061 = vpop.f32.mrb[0].mxu0
    %v1062 = vadd.f32 %v1022, %v1061
    %v1063 = vpop.f32.mrb[0].mxu0
    %v1064 = vpop.f32.mrb[0].mxu0
    %v1065 = vpop.f32.mrb[0].mxu0
    %1066 = vdwg.mxu0
    %1067 = vmatprep.subr.bf16.mxu0 0
    %1068 = vmatpush1.bf16.msra.mxu0 %v892
    %1069 = vmatprep.subr.bf16.mxu0 0
    %1070 = vmatpush1.bf16.msra.mxu0 %v893
    %1071 = vmatprep.subr.bf16.mxu0 0
    %1072 = vmatpush1.bf16.msra.mxu0 %v894
    %1073 = vmatprep.subr.bf16.mxu0 0
    %1074 = vmatpush1.bf16.msra.mxu0 %v895
    %1075 = vmatprep.subr.bf16.mxu0 0
    %1076 = vmatpush1.bf16.msra.mxu0 %v896
    %1077 = vmatprep.subr.bf16.mxu0 0
    %1078 = vmatpush1.bf16.msra.mxu0 %v897
    %1079 = vmatprep.subr.bf16.mxu0 0
    %1080 = vmatpush1.bf16.msra.mxu0 %v898
    %1081 = vmatprep.subr.bf16.mxu0 0
    %1082 = vmatpush1.bf16.msra.mxu0 %v899
    %1083 = vmatprep.subr.bf16.mxu0 0
    %1084 = vmatpush1.bf16.msra.mxu0 0
    %1085 = vmatprep.subr.bf16.mxu0 0
    %1086 = vmatpush1.bf16.msra.mxu0 0
    %1087 = vmatprep.subr.bf16.mxu0 0
    %1088 = vmatpush1.bf16.msra.mxu0 0
    %1089 = vmatprep.subr.bf16.mxu0 0
    %1090 = vmatpush1.bf16.msra.mxu0 0
    %1091 = vmatprep.subr.bf16.mxu0 0
    %1092 = vmatpush1.bf16.msra.mxu0 0
    %1093 = vmatprep.subr.bf16.mxu0 0
    %1094 = vmatpush1.bf16.msra.mxu0 0
    %1095 = vmatprep.subr.bf16.mxu0 0
    %1096 = vmatpush1.bf16.msra.mxu0 0
    %1097 = vmatprep.subr.bf16.mxu0 0
    %1098 = vmatpush1.bf16.msra.mxu0 0
    %1099 = vmatprep.mubr.bf16.mxu0 0
    %1100 = vmatmul.mubr.bf16.gmra.mrb[0].mxu0 %v823
    %v1101 = vpop.f32.mrb[0].mxu0
    %v1102 = vadd.f32 %v1062, %v1101
    %v1103 = vpop.f32.mrb[0].mxu0
    %v1104 = vpop.f32.mrb[0].mxu0
    %v1105 = vpop.f32.mrb[0].mxu0
    %1106 = vdwg.mxu0
    %1107 = vmax.xlane.f32.xlu0 %v1102
    %v1108 = vpop.xlane.xlu0 %1107
    %v1109 = vsub.f32 %v1102, %v1108
    %v1110 = vmul.f32 %v1109, 1.442695
    %v1111 = vpow.pop %v1110
    %1112 = vadd.xlane.f32.xlu0 %v1111
    %v1113 = vpop.xlane.xlu0 %1112
    %v1114 = vlog2.pop %v1113
    %v1115 = vmul.f32 %v1114, 0.6931472
    %v1116 = vadd.f32 %v1108, %v1115
    %v1117 = vmul.f32 %v1111, %v1102
    %1118 = vadd.xlane.f32.xlu0 %v1117
    %v1119 = vpop.xlane.xlu0 %1118
    %v1120 = vrcp.pop %v1113
    %v1121 = vmul.f32 %v1119, %v1120
    %v1122 = vsub.f32 %v1116, %v1121
    %v1123 = vld [vmem:[%s4] sm:$0xff]
    %1124 = vrot.lane.b32.xlu0 %v1123, 127
    %v1125 = vpop.permute.xlu0 %1124
    %v1126 = vmul.u32 %v1123, %v1125
    %v1127 = vlaneseq
    %v1128 = vand.u32 %v1127, 127
    %1129 = vset.pattern.permute.xlu0 0
    %1130 = vperm.xlu0 %1129, %v1126
    %v1131 = vpop.permute.xlu0 %1130
    %vm1132 = vcmp.eq.s32.totalorder %v1128, %v1131
    %v1133 = vsel %vm1132, %v1102, 0.0
    %1134 = vadd.xlane.f32.xlu0 %v1133
    %v1135 = vpop.xlane.xlu0 %1134
    %v1136 = vsub.f32 %v1116, %v1135
    %vm1137 = vcmp.eq.f32.partialorder %v1102, %v1108
    %v1138 = vsel %vm1137, %v1128, 128
    %v1139 = vand.u32 %v1138, 65535
    %v1140 = vshra.s32 %v1138, 16
    %v1141 = vcvt.s32.f32 %v1139
    %v1142 = vcvt.s32.f32 %v1140
    %1143 = vmin.xlane.f32.xlu0 %v1142
    %v1144 = vpop.xlane.xlu0 %1143
    %vm1145 = vcmp.eq.f32.partialorder %v1142, %v1144
    %v1146 = vsel %vm1145, %v1141, inf
    %1147 = vmin.xlane.f32.xlu0 %v1146
    %v1148 = vpop.xlane.xlu0 %1147
    %v1149 = vcvt.f32.s32 %v1148
    %v1150 = vcvt.f32.s32 %v1144
    %v1151 = vshll.u32 %v1150, 16
    %v1152 = vadd.s32 %v1151, %v1149
    %vm1153 = vcmp.eq.s32.totalorder %v1152, %v1126
    %v1154 = vsel %vm1153, 1, 0
    %v1155 = vcvt.s32.f32 %v1154
    %s1156 = sld [smem:[#allocation4]]
    %v1157 = vmul.f32 %v809, 0.125
    %v1158 = vstv %s1156
    %v1159 = vsub.f32 %v1136, %v1158
    %v1160 = vmul.f32 %v1159, %v1157
    %vm1161 = vcmask 7168
    %v1162 = vsel %vm1161, %v1160, 0.0
    %1163 = vadd.xlane.f32.xlu0 %v1162
    %v1164 = vpop.xlane.xlu0 %1163
    %v1165 = vrot.slane %v1164, 4
    %v1166 = vadd.f32 %v1164, %v1165
    %v1167 = vrot.slane %v1166, 2
    %v1168 = vadd.f32 %v1166, %v1167
    %v1169 = vrot.slane %v1168, 1
    %v1170 = vadd.f32 %v1168, %v1169
    %s1171 = vtos %v1170
    %v1172 = vstv %s1171
    %v1173 = vmul.f32 %v1172, 0.125
    %v1174 = vsel %vm1161, %v1136, 0.0
    %1175 = vadd.xlane.f32.xlu0 %v1174
    %v1176 = vpop.xlane.xlu0 %1175
    %v1177 = vrot.slane %v1176, 4
    %v1178 = vadd.f32 %v1176, %v1177
    %v1179 = vrot.slane %v1178, 2
    %v1180 = vadd.f32 %v1178, %v1179
    %v1181 = vrot.slane %v1180, 1
    %v1182 = vadd.f32 %v1180, %v1181
    %s1183 = vtos %v1182
    %v1184 = vstv %s1183
    %v1185 = vmul.f32 %v1184, 0.125
    %v1186 = vsel %vm1161, %v817, 0.0
    %1187 = vadd.xlane.f32.xlu0 %v1186
    %v1188 = vpop.xlane.xlu0 %1187
    %v1189 = vrot.slane %v1188, 4
    %v1190 = vadd.f32 %v1188, %v1189
    %v1191 = vrot.slane %v1190, 2
    %v1192 = vadd.f32 %v1190, %v1191
    %v1193 = vrot.slane %v1192, 1
    %v1194 = vadd.f32 %v1192, %v1193
    %s1195 = vtos %v1194
    %v1196 = vstv %s1195
    %v1197 = vmul.f32 %v1196, 0.015625
    %v1198 = vsel %vm1161, %v1122, 0.0
    %1199 = vadd.xlane.f32.xlu0 %v1198
    %v1200 = vpop.xlane.xlu0 %1199
    %v1201 = vrot.slane %v1200, 4
    %v1202 = vadd.f32 %v1200, %v1201
    %v1203 = vrot.slane %v1202, 2
    %v1204 = vadd.f32 %v1202, %v1203
    %v1205 = vrot.slane %v1204, 1
    %v1206 = vadd.f32 %v1204, %v1205
    %s1207 = vtos %v1206
    %v1208 = vstv %s1207
    %v1209 = vmul.f32 %v1208, 0.125
    %v1210 = vsel %vm1161, %v1155, 0.0
    %1211 = vadd.xlane.f32.xlu0 %v1210
    %v1212 = vpop.xlane.xlu0 %1211
    %v1213 = vrot.slane %v1212, 4
    %v1214 = vadd.f32 %v1212, %v1213
    %v1215 = vrot.slane %v1214, 2
    %v1216 = vadd.f32 %v1214, %v1215
    %v1217 = vrot.slane %v1216, 1
    %v1218 = vadd.f32 %v1216, %v1217
    %s1219 = vtos %v1218
    %v1220 = vstv %s1219
    %v1221 = vmul.f32 %v1220, 0.125
    %v1222 = vadd.f32 %v1173, %v1185
    %v1223 = vmul.f32 %v1197, 0.2
    %v1224 = vsub.f32 %v1222, %v1223
    %vm1225 = vcmp.eq.s32.totalorder %v1128, 0
    %v1226 = vsel %vm1225, 1, 0
    %v1227 = vcvt.s32.f32 %v1226
    %v1228 = vmul.f32 %v1224, %v1227
    %vm1229 = vcmp.eq.s32.totalorder %v1128, 1
    %v1230 = vsel %vm1229, 1, 0
    %v1231 = vcvt.s32.f32 %v1230
    %v1232 = vmul.f32 %v1221, %v1231
    %v1233 = vadd.f32 %v1228, %v1232
    %vm1234 = vcmp.eq.s32.totalorder %v1128, 2
    %v1235 = vsel %vm1234, 1, 0
    %v1236 = vcvt.s32.f32 %v1235
    %v1237 = vmul.f32 %v1197, %v1236
    %v1238 = vadd.f32 %v1233, %v1237
    %vm1239 = vcmp.eq.s32.totalorder %v1128, 3
    %v1240 = vsel %vm1239, 1, 0
    %v1241 = vcvt.s32.f32 %v1240
    %v1242 = vmul.f32 %v1209, %v1241
    %v1243 = vadd.f32 %v1238, %v1242
    %vm1244 = vcmp.eq.s32.totalorder %v1128, 4
    %v1245 = vsel %vm1244, 1, 0
    %v1246 = vcvt.s32.f32 %v1245
    %v1247 = vmul.f32 %v1185, %v1246
    %v1248 = vadd.f32 %v1243, %v1247
    %1249 = vst [vmem:[%s8] sm:$0x1] %v1248
    // Predicated region
    $region38: #{_game_step.1} parent=1 // pred_check
      _
    $region39: #{_game_step.1} parent=1 // pred_check_branch
      %1251 = sbr.rel (0) target = $region41
    $region40: #{_game_step.1} parent=1 // pred_region
      _
    $region41: #{_game_step.1} parent=1 // pred_fallthru
      _
    // Predicated region
    $region42: #{_game_step.1} parent=1 // pred_check
      _
    $region43: #{_game_step.1} parent=1 // pred_check_branch
      %1253 = sbr.rel (0) target = $region45
    $region44: #{_game_step.1} parent=1 // pred_region
      _
    $region45: #{_game_step.1} parent=1 // pred_fallthru
      _
    %1254 = vsyncpa [#allocation6], 1
  %1255 = vsyncmov [#allocation3]
  %s1256 = vpop.sfrf %1255
  %p1257 = scmp.eq.s32.totalorder %s1256, 0
  %p1258 = pneg %p1257
  %1260 = shalt.err (%p1258)

</llo_original>
